<compile_context>
chip_gen: v6e
topology: v6e:2x2x1
jax: 0.10.0
libtpu: 0.0.40
codegen_flags: <defaults>
</compile_context>

<pallas_src>
import functools

import jax
import jax.numpy as jnp
from jax import lax
from jax.experimental import pallas as pl
from jax.experimental.pallas import tpu as pltpu


def _cross_attention_kernel(x_ref, ctx_ref, wq_ref, wk_ref, wv_ref, wo_ref, bo_ref,
                            out_ref, k_cache, v_cache, *, heads, dim_head, compute_dtype):
    """One (batch b, q-tile i) grid step of fused multi-head cross-attention.

    x_ref   : (1, tq, Dq)   query-token tile for batch b            (compute_dtype)
    ctx_ref : (1, M, Dc)    context tokens for batch b              (compute_dtype)
    wq_ref  : (Dq, h*d)     to_q.weight^T, pre-scaled by dim_head**-0.5
    wk_ref  : (Dc, h*d)     to_k.weight^T
    wv_ref  : (Dc, h*d)     to_v.weight^T
    wo_ref  : (h*d, Dq)     to_out[0].weight^T
    bo_ref  : (1, Dq)       to_out[0].bias (original dtype; tiny, kept high precision)
    out_ref : (1, tq, Dq)   written exactly once per grid step
    k_cache : (M, h*d) VMEM scratch — K projection, computed once per batch
    v_cache : (M, h*d) VMEM scratch — V projection, computed once per batch
    """
    compute_dtype = jnp.dtype(compute_dtype)
    exact = compute_dtype == jnp.dtype(jnp.float32)

    # ---- K/V projections: only on the first q-tile of each batch (q axis is "arbitrary"). ----
    @pl.when(pl.program_id(1) == 0)
    def _():
        ctx = ctx_ref[0]                                               # (M, Dc)
        k_cache[...] = jnp.dot(ctx, wk_ref[...],
                               preferred_element_type=jnp.float32).astype(compute_dtype)
        v_cache[...] = jnp.dot(ctx, wv_ref[...],
                               preferred_element_type=jnp.float32).astype(compute_dtype)

    # ---- Q projection for this tile (scale already folded into Wq). ----
    x = x_ref[0]                                                       # (tq, Dq)
    q = jnp.dot(x, wq_ref[...], preferred_element_type=jnp.float32)   # (tq, h*d), f32 acc
    q = q.astype(compute_dtype)                                        # one full-width cast

    # ---- Per-head attention.  Output projection is accumulated per head (sublane-aligned Wo
    #      row slices) unless heads are lane-aligned, in which case one concat + matmul is used.
    lane_aligned_heads = (dim_head % 128 == 0)
    acc = None
    head_outs = []
    for h in range(heads):                                             # static, unrolled
        sl = slice(h * dim_head, (h + 1) * dim_head)
        qh = q[:, sl]                                                  # (tq, d)
        kh = k_cache[:, sl]                                            # (M,  d)
        vh = v_cache[:, sl]                                            # (M,  d)

        # q @ k^T without an explicit transpose: contract dim 1 of q with dim 1 of k.
        sim = lax.dot_general(qh, kh, (((1,), (1,)), ((), ())),
                              preferred_element_type=jnp.float32)      # (tq, M)

        # Numerically-stable softmax over the context axis, in f32.
        sim = sim - jnp.max(sim, axis=-1, keepdims=True)
        p = jnp.exp(sim)
        # TODO(synk): bf16 exp on v6e/v7x (not v5e) if profiling shows the EUP slot binding.
        denom = jnp.sum(p, axis=-1, keepdims=True)
        if exact:
            p = p / denom                                              # exact fp32 path
        else:
            p = p * pl.reciprocal(denom, approx=True)                  # EUP reciprocal

        oh = jnp.dot(p.astype(compute_dtype), vh,
                     preferred_element_type=jnp.float32)               # (tq, d), f32

        if lane_aligned_heads:
            head_outs.append(oh)
        else:
            contrib = jnp.dot(oh.astype(compute_dtype), wo_ref[sl, :],
                              preferred_element_type=jnp.float32)      # (tq, Dq)
            acc = contrib if acc is None else acc + contrib

    if lane_aligned_heads:
        o = jnp.concatenate(head_outs, axis=-1).astype(compute_dtype)  # (tq, h*d)
        acc = jnp.dot(o, wo_ref[...], preferred_element_type=jnp.float32)

    out = acc + bo_ref[...].astype(jnp.float32)                        # (tq, Dq)
    out_ref[...] = out[None, :, :].astype(out_ref.dtype)               # single store per step


def _vmem_capacity_bytes():
    try:
        return int(pltpu.get_tpu_info().vmem_capacity_bytes)
    except Exception:
        return 64 << 20          # conservative default: v7x per-TensorCore VMEM


def _estimate_vmem_bytes(tq, M, Dq, Dc, inner, *, io_bytes, out_bytes, param_bytes,
                         compute_bytes, weight_buffers):
    """Rough upper bound on VMEM needed by the pipeline + scratch + in-body temporaries."""
    weights = weight_buffers * (Dq * inner + 2 * Dc * inner + inner * Dq + Dq) * param_bytes
    blocks = 2 * (tq * Dq * io_bytes          # x tile      (double-buffered)
                  + M * Dc * io_bytes         # context     (double-buffered, changes per batch)
                  + tq * Dq * out_bytes)      # output tile (double-buffered)
    kv_cache = 2 * M * inner * compute_bytes  # K/V scratch (resident, single copy)
    interm = 4 * (tq * inner + 2 * tq * M + 2 * tq * Dq)   # f32 temporaries (q, sim/p, acc, out)
    return weights + blocks + kv_cache + interm


def _choose_q_tile(n, *, sublane, fits):
    """Whole N when small; else the biggest sublane-aligned divisor of N (<=1024) that fits VMEM."""
    if n <= 512:
        return n
    for t in range(min(n, 1024), sublane - 1, -1):
        if n % t == 0 and t % sublane == 0 and fits(t):
            return t
    # TODO(synk): KV/context tiling (online softmax) when no aligned q-tile fits the VMEM budget.
    return n


def cross_attention(x, context, wq, wk, wv, wo, bo, *, heads, dim_head,
                    compute_dtype=jnp.float32, q_tile=None, single_buffer_weights=True):
    """Fused CrossAttention forward.

    x:       (B, N, Dq)
    context: (B, M, Dc)   (pass x for the context=None / self-attention case)
    wq: (Dq, heads*dim_head)  == to_q.weight.T      wk/wv: (Dc, heads*dim_head)
    wo: (heads*dim_head, Dq)  == to_out[0].weight.T  bo: (1, Dq) == to_out[0].bias
    compute_dtype: jnp.float32 (matches _ATTN_PRECISION='fp32') or jnp.bfloat16 (bf16 matmul
                   operands, f32 accumulate/softmax — recommended on v6e/v7x).
    returns (B, N, Dq) in x.dtype.
    """
    compute_dtype = jnp.dtype(compute_dtype)
    B, N, Dq = x.shape
    _, M, Dc = context.shape
    inner = heads * dim_head
    scale = dim_head ** (-0.5)

    # Fold the attention scale into Wq once, then cast everything to the compute dtype at the
    # pallas_call boundary (halves DMA bytes & VMEM residency for bf16; no in-kernel weight casts).
    wq_scaled = wq.astype(jnp.float32) * scale
    x_c = x.astype(compute_dtype)
    ctx_c = context.astype(compute_dtype)
    wq_c = wq_scaled.astype(compute_dtype)
    wk_c = wk.astype(compute_dtype)
    wv_c = wv.astype(compute_dtype)
    wo_c = wo.astype(compute_dtype)
    bo_c = bo                                   # (1, Dq): negligible bytes, kept high precision

    io_bytes = compute_dtype.itemsize
    out_bytes = jnp.dtype(x.dtype).itemsize
    param_bytes = compute_dtype.itemsize
    compute_bytes = compute_dtype.itemsize
    weight_buffers = 1 if single_buffer_weights else 2

    capacity = _vmem_capacity_bytes()
    budget = int(0.75 * capacity)               # headroom for compiler-internal scratch

    def fits(t):
        return _estimate_vmem_bytes(t, M, Dq, Dc, inner, io_bytes=io_bytes, out_bytes=out_bytes,
                                    param_bytes=param_bytes, compute_bytes=compute_bytes,
                                    weight_buffers=weight_buffers) <= budget

    sublane = 16 if compute_dtype.itemsize == 2 else 8
    tq = q_tile if q_tile is not None else _choose_q_tile(N, sublane=sublane, fits=fits)
    assert N % tq == 0, "query tile must divide N"
    num_q_tiles = N // tq

    needed = _estimate_vmem_bytes(tq, M, Dq, Dc, inner, io_bytes=io_bytes, out_bytes=out_bytes,
                                  param_bytes=param_bytes, compute_bytes=compute_bytes,
                                  weight_buffers=weight_buffers)
    vmem_limit = int(min(int(0.9 * capacity), max(32 << 20, 2 * needed)))

    kernel = functools.partial(_cross_attention_kernel, heads=heads, dim_head=dim_head,
                               compute_dtype=compute_dtype)

    # K/V caching across q-tiles requires the q-tile axis to run sequentially within a batch
    # ("arbitrary"); batch stays "parallel" for megacore sharding.
    q_axis = "arbitrary" if num_q_tiles > 1 else "parallel"

    def build(use_single_buffer):
        def const_spec(shape):
            idx = lambda b, i: (0,) * len(shape)
            if use_single_buffer:
                # Constant-index blocks are never re-fetched; double-buffering them wastes VMEM.
                return pl.BlockSpec(shape, idx, pipeline_mode=pl.Buffered(1))
            return pl.BlockSpec(shape, idx)

        return pl.pallas_call(
            kernel,
            out_shape=jax.ShapeDtypeStruct((B, N, Dq), x.dtype),
            grid_spec=pltpu.PrefetchScalarGridSpec(
                num_scalar_prefetch=0,
                grid=(B, num_q_tiles),
                in_specs=[
                    pl.BlockSpec((1, tq, Dq), lambda b, i: (b, i, 0)),   # x q-tile
                    pl.BlockSpec((1, M, Dc), lambda b, i: (b, 0, 0)),    # context (per batch)
                    const_spec((Dq, inner)),                             # Wq (pre-scaled)
                    const_spec((Dc, inner)),                             # Wk
                    const_spec((Dc, inner)),                             # Wv
                    const_spec((inner, Dq)),                             # Wo
                    const_spec((1, Dq)),                                 # bias
                ],
                out_specs=pl.BlockSpec((1, tq, Dq), lambda b, i: (b, i, 0)),
                scratch_shapes=[
                    pltpu.VMEM((M, inner), compute_dtype),               # K cache
                    pltpu.VMEM((M, inner), compute_dtype),               # V cache
                ]),
            compiler_params=pltpu.CompilerParams(
                dimension_semantics=("parallel", q_axis),
                vmem_limit_bytes=vmem_limit),
        )

    operands = (x_c, ctx_c, wq_c, wk_c, wv_c, wo_c, bo_c)
    if single_buffer_weights:
        try:
            return build(True)(*operands)
        except Exception:
            # TODO(synk): pl.Buffered(1) single-buffering rejected by this jax build; falling
            # back to default double-buffered weight blocks.
            pass
    return build(False)(*operands)


def cross_attention_ref(x, context, wq, wk, wv, wo, bo, *, heads, dim_head):
    """Pure-JAX reference mirroring the PyTorch forward."""
    B, N, _ = x.shape
    M = context.shape[1]
    scale = dim_head ** (-0.5)
    q = x @ wq            # (B, N, h*d)
    k = context @ wk      # (B, M, h*d)
    v = context @ wv      # (B, M, h*d)

    def split(t, L):
        return t.reshape(B, L, heads, dim_head).transpose(0, 2, 1, 3)  # (B, h, L, d)

    qh, kh, vh = split(q, N), split(k, M), split(v, M)
    sim = jnp.einsum('bhid,bhjd->bhij', qh, kh) * scale
    p = jax.nn.softmax(sim, axis=-1)
    o = jnp.einsum('bhij,bhjd->bhid', p, vh)               # (B, h, N, d)
    o = o.transpose(0, 2, 1, 3).reshape(B, N, heads * dim_head)
    return o @ wo + bo


if __name__ == "__main__":
    # Small synthetic configuration consistent with the module's __init__.
    B, N, M = 2, 16, 12
    query_dim, context_dim = 32, 48
    heads, dim_head = 2, 16
    inner_dim = heads * dim_head

    key = jax.random.PRNGKey(0)
    kx, kc, k1, k2, k3, k4, k5 = jax.random.split(key, 7)

    x = jax.random.normal(kx, (B, N, query_dim), dtype=jnp.float32)
    context = jax.random.normal(kc, (B, M, context_dim), dtype=jnp.float32)

    # Deterministic parameter init (stored pre-transposed: y = x @ W).
    wq = 0.05 * jax.random.normal(k1, (query_dim, inner_dim), dtype=jnp.float32)
    wk = 0.05 * jax.random.normal(k2, (context_dim, inner_dim), dtype=jnp.float32)
    wv = 0.05 * jax.random.normal(k3, (context_dim, inner_dim), dtype=jnp.float32)
    wo = 0.05 * jax.random.normal(k4, (inner_dim, query_dim), dtype=jnp.float32)
    bo = 0.05 * jax.random.normal(k5, (1, query_dim), dtype=jnp.float32)

    ref = cross_attention_ref(x, context, wq, wk, wv, wo, bo,
                              heads=heads, dim_head=dim_head)

    # f32 compute path, single q-tile (matches the module's fp32 attention-precision branch).
    out_f32 = cross_attention(x, context, wq, wk, wv, wo, bo,
                              heads=heads, dim_head=dim_head,
                              compute_dtype=jnp.float32)
    out_f32 = jax.block_until_ready(out_f32)
    assert out_f32.shape == (B, N, query_dim)
    assert jnp.allclose(out_f32, ref, atol=5e-3, rtol=5e-3), "f32 kernel mismatch vs reference"

    # f32 compute path with forced q tiling: exercises the KV-cache-across-q-tiles ("arbitrary"
    # q axis + pl.when(i==0) projection) path on a (B, 2) grid.
    out_f32_tiled = cross_attention(x, context, wq, wk, wv, wo, bo,
                                    heads=heads, dim_head=dim_head,
                                    compute_dtype=jnp.float32, q_tile=8)
    out_f32_tiled = jax.block_until_ready(out_f32_tiled)
    assert jnp.allclose(out_f32_tiled, ref, atol=5e-3, rtol=5e-3), \
        "tiled f32 kernel mismatch vs reference"

    # bf16 compute path (boundary-cast operands, f32 accumulate/softmax).
    out_bf16 = cross_attention(x, context, wq, wk, wv, wo, bo,
                               heads=heads, dim_head=dim_head,
                               compute_dtype=jnp.bfloat16)
    out_bf16 = jax.block_until_ready(out_bf16)
    assert jnp.allclose(out_bf16, ref, atol=5e-2, rtol=5e-2), "bf16 kernel mismatch vs reference"

    print("KERNEL_OK")
</pallas_src>

<mosaic_0001>
module attributes {stable_mosaic.version = 11 : i64} {
  func.func @_cross_attention_kernel(%arg0: i32, %arg1: i32, %arg2: memref<1x16x32xf32, #tpu.memory_space<vmem>>, %arg3: memref<1x12x48xf32, #tpu.memory_space<vmem>>, %arg4: memref<32x32xf32, #tpu.memory_space<vmem>>, %arg5: memref<48x32xf32, #tpu.memory_space<vmem>>, %arg6: memref<48x32xf32, #tpu.memory_space<vmem>>, %arg7: memref<32x32xf32, #tpu.memory_space<vmem>>, %arg8: memref<1x32xf32, #tpu.memory_space<vmem>>, %arg9: memref<1x16x32xf32, #tpu.memory_space<vmem>>, %arg10: memref<12x32xf32, #tpu.memory_space<vmem>>, %arg11: memref<12x32xf32, #tpu.memory_space<vmem>>) attributes {dimension_semantics = [#tpu.dimension_semantics<parallel>, #tpu.dimension_semantics<parallel>], iteration_bounds = array<i64: 2, 1>, scalar_prefetch = 0 : i64, scratch_operands = 2 : i64, tpu.core_type = #tpu.core_type<tc>, window_params = [{transform_indices = @transform_0, window_bounds = array<i64: 1, 16, 32>}, {transform_indices = @transform_1, window_bounds = array<i64: 1, 12, 48>}, {pipeline_mode = #tpu.pipeline_mode<synchronous>, transform_indices = @transform_2, window_bounds = array<i64: 32, 32>}, {pipeline_mode = #tpu.pipeline_mode<synchronous>, transform_indices = @transform_3, window_bounds = array<i64: 48, 32>}, {pipeline_mode = #tpu.pipeline_mode<synchronous>, transform_indices = @transform_4, window_bounds = array<i64: 48, 32>}, {pipeline_mode = #tpu.pipeline_mode<synchronous>, transform_indices = @transform_5, window_bounds = array<i64: 32, 32>}, {pipeline_mode = #tpu.pipeline_mode<synchronous>, transform_indices = @transform_6, window_bounds = array<i64: 1, 32>}, {transform_indices = @transform_7, window_bounds = array<i64: 1, 16, 32>}]} {
    %c0_i32 = arith.constant 0 : i32
    %0 = arith.cmpi eq, %arg1, %c0_i32 : i32
    %1 = arith.extui %0 : i1 to i32
    %c0_i32_0 = arith.constant 0 : i32
    %2 = arith.cmpi ne, %1, %c0_i32_0 : i32
    scf.if %2 {
      %c0_31 = arith.constant 0 : index
      %c0_32 = arith.constant 0 : index
      %c0_33 = arith.constant 0 : index
      %45 = vector.load %arg3[%c0_31, %c0_32, %c0_33] : memref<1x12x48xf32, #tpu.memory_space<vmem>>, vector<1x12x48xf32>
      %46 = vector.shape_cast %45 : vector<1x12x48xf32> to vector<12x48xf32>
      %c0_34 = arith.constant 0 : index
      %c0_35 = arith.constant 0 : index
      %47 = vector.load %arg5[%c0_34, %c0_35] : memref<48x32xf32, #tpu.memory_space<vmem>>, vector<48x32xf32>
      %cst_36 = arith.constant dense<0.000000e+00> : vector<12x32xf32>
      %48 = tpu.matmul %46, %47, %cst_36 {dimension_numbers = #tpu.dot_dimension_numbers<[1], [0], [0], [1], [0, 0, 1, 1], [], []>} : vector<12x48xf32>, vector<48x32xf32>, vector<12x32xf32> -> vector<12x32xf32>
      %c0_37 = arith.constant 0 : index
      %c0_38 = arith.constant 0 : index
      %49 = vector.load %arg10[%c0_37, %c0_38] : memref<12x32xf32, #tpu.memory_space<vmem>>, vector<12x32xf32>
      tpu.vector_store %arg10[%c0_37, %c0_38], %48 {strides = array<i32>} : memref<12x32xf32, #tpu.memory_space<vmem>>, vector<12x32xf32>,
      %c0_39 = arith.constant 0 : index
      %c0_40 = arith.constant 0 : index
      %50 = vector.load %arg6[%c0_39, %c0_40] : memref<48x32xf32, #tpu.memory_space<vmem>>, vector<48x32xf32>
      %cst_41 = arith.constant dense<0.000000e+00> : vector<12x32xf32>
      %51 = tpu.matmul %46, %50, %cst_41 {dimension_numbers = #tpu.dot_dimension_numbers<[1], [0], [0], [1], [0, 0, 1, 1], [], []>} : vector<12x48xf32>, vector<48x32xf32>, vector<12x32xf32> -> vector<12x32xf32>
      %c0_42 = arith.constant 0 : index
      %c0_43 = arith.constant 0 : index
      %52 = vector.load %arg11[%c0_42, %c0_43] : memref<12x32xf32, #tpu.memory_space<vmem>>, vector<12x32xf32>
      tpu.vector_store %arg11[%c0_42, %c0_43], %51 {strides = array<i32>} : memref<12x32xf32, #tpu.memory_space<vmem>>, vector<12x32xf32>,
    } else {
    }
    %c0 = arith.constant 0 : index
    %c0_1 = arith.constant 0 : index
    %c0_2 = arith.constant 0 : index
    %3 = vector.load %arg2[%c0, %c0_1, %c0_2] : memref<1x16x32xf32, #tpu.memory_space<vmem>>, vector<1x16x32xf32>
    %4 = vector.shape_cast %3 : vector<1x16x32xf32> to vector<16x32xf32>
    %c0_3 = arith.constant 0 : index
    %c0_4 = arith.constant 0 : index
    %5 = vector.load %arg4[%c0_3, %c0_4] : memref<32x32xf32, #tpu.memory_space<vmem>>, vector<32x32xf32>
    %cst = arith.constant dense<0.000000e+00> : vector<16x32xf32>
    %6 = tpu.matmul %4, %5, %cst {dimension_numbers = #tpu.dot_dimension_numbers<[1], [0], [0], [1], [0, 0, 1, 1], [], []>} : vector<16x32xf32>, vector<32x32xf32>, vector<16x32xf32> -> vector<16x32xf32>
    %7 = vector.extract_strided_slice %6 {offsets = [0, 0], sizes = [16, 16], strides = [1, 1]} : vector<16x32xf32> to vector<16x16xf32>
    %c0_5 = arith.constant 0 : index
    %c0_6 = arith.constant 0 : index
    %8 = vector.load %arg10[%c0_5, %c0_6] : memref<12x32xf32, #tpu.memory_space<vmem>>, vector<12x16xf32>
    %c0_7 = arith.constant 0 : index
    %c0_8 = arith.constant 0 : index
    %9 = vector.load %arg11[%c0_7, %c0_8] : memref<12x32xf32, #tpu.memory_space<vmem>>, vector<12x16xf32>
    %cst_9 = arith.constant dense<0.000000e+00> : vector<16x12xf32>
    %10 = tpu.matmul %7, %8, %cst_9 {dimension_numbers = #tpu.dot_dimension_numbers<[1], [1], [0], [0], [0, 0, 1, 0], [], []>} : vector<16x16xf32>, vector<12x16xf32>, vector<16x12xf32> -> vector<16x12xf32>
    %cst_10 = arith.constant dense<0xFF800000> : vector<16xf32>
    %11 = vector.multi_reduction <maximumf>, %10, %cst_10 [1] : vector<16x12xf32> to vector<16xf32>
    %12 = vector.shape_cast %11 : vector<16xf32> to vector<16x1xf32>
    %13 = vector.broadcast %12 : vector<16x1xf32> to vector<16x12xf32>
    %14 = arith.subf %10, %13 : vector<16x12xf32>
    %15 = math.exp %14 : vector<16x12xf32>
    %cst_11 = arith.constant dense<0.000000e+00> : vector<16xf32>
    %16 = vector.multi_reduction <add>, %15, %cst_11 [1] : vector<16x12xf32> to vector<16xf32>
    %17 = vector.shape_cast %16 : vector<16xf32> to vector<16x1xf32>
    %18 = vector.broadcast %17 : vector<16x1xf32> to vector<16x12xf32>
    %19 = arith.divf %15, %18 : vector<16x12xf32>
    %cst_12 = arith.constant dense<0.000000e+00> : vector<16x16xf32>
    %20 = tpu.matmul %19, %9, %cst_12 {dimension_numbers = #tpu.dot_dimension_numbers<[1], [0], [0], [1], [0, 0, 1, 1], [], []>} : vector<16x12xf32>, vector<12x16xf32>, vector<16x16xf32> -> vector<16x16xf32>
    %c0_13 = arith.constant 0 : index
    %c0_14 = arith.constant 0 : index
    %21 = vector.load %arg7[%c0_13, %c0_14] : memref<32x32xf32, #tpu.memory_space<vmem>>, vector<16x32xf32>
    %cst_15 = arith.constant dense<0.000000e+00> : vector<16x32xf32>
    %22 = tpu.matmul %20, %21, %cst_15 {dimension_numbers = #tpu.dot_dimension_numbers<[1], [0], [0], [1], [0, 0, 1, 1], [], []>} : vector<16x16xf32>, vector<16x32xf32>, vector<16x32xf32> -> vector<16x32xf32>
    %23 = vector.extract_strided_slice %6 {offsets = [0, 16], sizes = [16, 16], strides = [1, 1]} : vector<16x32xf32> to vector<16x16xf32>
    %c0_16 = arith.constant 0 : index
    %c16 = arith.constant 16 : index
    %24 = vector.load %arg10[%c0_16, %c16] : memref<12x32xf32, #tpu.memory_space<vmem>>, vector<12x16xf32>
    %c0_17 = arith.constant 0 : index
    %c16_18 = arith.constant 16 : index
    %25 = vector.load %arg11[%c0_17, %c16_18] : memref<12x32xf32, #tpu.memory_space<vmem>>, vector<12x16xf32>
    %cst_19 = arith.constant dense<0.000000e+00> : vector<16x12xf32>
    %26 = tpu.matmul %23, %24, %cst_19 {dimension_numbers = #tpu.dot_dimension_numbers<[1], [1], [0], [0], [0, 0, 1, 0], [], []>} : vector<16x16xf32>, vector<12x16xf32>, vector<16x12xf32> -> vector<16x12xf32>
    %cst_20 = arith.constant dense<0xFF800000> : vector<16xf32>
    %27 = vector.multi_reduction <maximumf>, %26, %cst_20 [1] : vector<16x12xf32> to vector<16xf32>
    %28 = vector.shape_cast %27 : vector<16xf32> to vector<16x1xf32>
    %29 = vector.broadcast %28 : vector<16x1xf32> to vector<16x12xf32>
    %30 = arith.subf %26, %29 : vector<16x12xf32>
    %31 = math.exp %30 : vector<16x12xf32>
    %cst_21 = arith.constant dense<0.000000e+00> : vector<16xf32>
    %32 = vector.multi_reduction <add>, %31, %cst_21 [1] : vector<16x12xf32> to vector<16xf32>
    %33 = vector.shape_cast %32 : vector<16xf32> to vector<16x1xf32>
    %34 = vector.broadcast %33 : vector<16x1xf32> to vector<16x12xf32>
    %35 = arith.divf %31, %34 : vector<16x12xf32>
    %cst_22 = arith.constant dense<0.000000e+00> : vector<16x16xf32>
    %36 = tpu.matmul %35, %25, %cst_22 {dimension_numbers = #tpu.dot_dimension_numbers<[1], [0], [0], [1], [0, 0, 1, 1], [], []>} : vector<16x12xf32>, vector<12x16xf32>, vector<16x16xf32> -> vector<16x16xf32>
    %c16_23 = arith.constant 16 : index
    %c0_24 = arith.constant 0 : index
    %37 = vector.load %arg7[%c16_23, %c0_24] : memref<32x32xf32, #tpu.memory_space<vmem>>, vector<16x32xf32>
    %cst_25 = arith.constant dense<0.000000e+00> : vector<16x32xf32>
    %38 = tpu.matmul %36, %37, %cst_25 {dimension_numbers = #tpu.dot_dimension_numbers<[1], [0], [0], [1], [0, 0, 1, 1], [], []>} : vector<16x16xf32>, vector<16x32xf32>, vector<16x32xf32> -> vector<16x32xf32>
    %39 = arith.addf %22, %38 : vector<16x32xf32>
    %c0_26 = arith.constant 0 : index
    %c0_27 = arith.constant 0 : index
    %40 = vector.load %arg8[%c0_26, %c0_27] : memref<1x32xf32, #tpu.memory_space<vmem>>, vector<1x32xf32>
    %41 = vector.broadcast %40 : vector<1x32xf32> to vector<16x32xf32>
    %42 = arith.addf %39, %41 : vector<16x32xf32>
    %43 = vector.shape_cast %42 : vector<16x32xf32> to vector<1x16x32xf32>
    %c0_28 = arith.constant 0 : index
    %c0_29 = arith.constant 0 : index
    %c0_30 = arith.constant 0 : index
    %44 = vector.load %arg9[%c0_28, %c0_29, %c0_30] : memref<1x16x32xf32, #tpu.memory_space<vmem>>, vector<1x16x32xf32>
    tpu.vector_store %arg9[%c0_28, %c0_29, %c0_30], %43 {strides = array<i32>} : memref<1x16x32xf32, #tpu.memory_space<vmem>>, vector<1x16x32xf32>,
    return
  }
  func.func @transform_0(%arg0: i32, %arg1: i32) -> (i32, i32, i32) {
    %c0_i32 = arith.constant 0 : i32
    %c0_i32_0 = arith.constant 0 : i32
    return %arg0, %arg1, %c0_i32 : i32, i32, i32
  }
  func.func @transform_1(%arg0: i32, %arg1: i32) -> (i32, i32, i32) {
    %c0_i32 = arith.constant 0 : i32
    %c0_i32_0 = arith.constant 0 : i32
    %c0_i32_1 = arith.constant 0 : i32
    return %arg0, %c0_i32, %c0_i32_0 : i32, i32, i32
  }
  func.func @transform_2(%arg0: i32, %arg1: i32) -> (i32, i32) {
    %c0_i32 = arith.constant 0 : i32
    %c0_i32_0 = arith.constant 0 : i32
    %c0_i32_1 = arith.constant 0 : i32
    return %c0_i32, %c0_i32_0 : i32, i32
  }
  func.func @transform_3(%arg0: i32, %arg1: i32) -> (i32, i32) {
    %c0_i32 = arith.constant 0 : i32
    %c0_i32_0 = arith.constant 0 : i32
    %c0_i32_1 = arith.constant 0 : i32
    return %c0_i32, %c0_i32_0 : i32, i32
  }
  func.func @transform_4(%arg0: i32, %arg1: i32) -> (i32, i32) {
    %c0_i32 = arith.constant 0 : i32
    %c0_i32_0 = arith.constant 0 : i32
    %c0_i32_1 = arith.constant 0 : i32
    return %c0_i32, %c0_i32_0 : i32, i32
  }
  func.func @transform_5(%arg0: i32, %arg1: i32) -> (i32, i32) {
    %c0_i32 = arith.constant 0 : i32
    %c0_i32_0 = arith.constant 0 : i32
    %c0_i32_1 = arith.constant 0 : i32
    return %c0_i32, %c0_i32_0 : i32, i32
  }
  func.func @transform_6(%arg0: i32, %arg1: i32) -> (i32, i32) {
    %c0_i32 = arith.constant 0 : i32
    %c0_i32_0 = arith.constant 0 : i32
    %c0_i32_1 = arith.constant 0 : i32
    return %c0_i32, %c0_i32_0 : i32, i32
  }
  func.func @transform_7(%arg0: i32, %arg1: i32) -> (i32, i32, i32) {
    %c0_i32 = arith.constant 0 : i32
    %c0_i32_0 = arith.constant 0 : i32
    return %arg0, %arg1, %c0_i32 : i32, i32, i32
  }
}

module attributes {stable_mosaic.version = 11 : i64} {
  func.func @_cross_attention_kernel(%arg0: i32, %arg1: i32, %arg2: memref<1x16x32xf32, #tpu.memory_space<vmem>>, %arg3: memref<1x12x48xf32, #tpu.memory_space<vmem>>, %arg4: memref<32x32xf32, #tpu.memory_space<vmem>>, %arg5: memref<48x32xf32, #tpu.memory_space<vmem>>, %arg6: memref<48x32xf32, #tpu.memory_space<vmem>>, %arg7: memref<32x32xf32, #tpu.memory_space<vmem>>, %arg8: memref<1x32xf32, #tpu.memory_space<vmem>>, %arg9: memref<1x16x32xf32, #tpu.memory_space<vmem>>, %arg10: memref<12x32xf32, #tpu.memory_space<vmem>>, %arg11: memref<12x32xf32, #tpu.memory_space<vmem>>) attributes {dimension_semantics = [#tpu.dimension_semantics<parallel>, #tpu.dimension_semantics<parallel>], iteration_bounds = array<i64: 2, 1>, scalar_prefetch = 0 : i64, scratch_operands = 2 : i64, tpu.core_type = #tpu.core_type<tc>, window_params = [{transform_indices = @transform_0, window_bounds = array<i64: 1, 16, 32>}, {transform_indices = @transform_1, window_bounds = array<i64: 1, 12, 48>}, {pipeline_mode = #tpu.pipeline_mode<synchronous>, transform_indices = @transform_2, window_bounds = array<i64: 32, 32>}, {pipeline_mode = #tpu.pipeline_mode<synchronous>, transform_indices = @transform_3, window_bounds = array<i64: 48, 32>}, {pipeline_mode = #tpu.pipeline_mode<synchronous>, transform_indices = @transform_4, window_bounds = array<i64: 48, 32>}, {pipeline_mode = #tpu.pipeline_mode<synchronous>, transform_indices = @transform_5, window_bounds = array<i64: 32, 32>}, {pipeline_mode = #tpu.pipeline_mode<synchronous>, transform_indices = @transform_6, window_bounds = array<i64: 1, 32>}, {transform_indices = @transform_7, window_bounds = array<i64: 1, 16, 32>}]} {
    %c0_i32 = arith.constant 0 : i32
    %0 = arith.cmpi eq, %arg1, %c0_i32 : i32
    %1 = arith.extui %0 : i1 to i32
    %c0_i32_0 = arith.constant 0 : i32
    %2 = arith.cmpi ne, %1, %c0_i32_0 : i32
    scf.if %2 {
      %c0_31 = arith.constant 0 : index
      %c0_32 = arith.constant 0 : index
      %c0_33 = arith.constant 0 : index
      %45 = vector.load %arg3[%c0_31, %c0_32, %c0_33] : memref<1x12x48xf32, #tpu.memory_space<vmem>>, vector<1x12x48xf32>
      %46 = vector.shape_cast %45 : vector<1x12x48xf32> to vector<12x48xf32>
      %c0_34 = arith.constant 0 : index
      %c0_35 = arith.constant 0 : index
      %47 = vector.load %arg5[%c0_34, %c0_35] : memref<48x32xf32, #tpu.memory_space<vmem>>, vector<48x32xf32>
      %cst_36 = arith.constant dense<0.000000e+00> : vector<12x32xf32>
      %48 = tpu.matmul %46, %47, %cst_36 {dimension_numbers = #tpu.dot_dimension_numbers<[1], [0], [0], [1], [0, 0, 1, 1], [], []>} : vector<12x48xf32>, vector<48x32xf32>, vector<12x32xf32> -> vector<12x32xf32>
      %c0_37 = arith.constant 0 : index
      %c0_38 = arith.constant 0 : index
      %49 = vector.load %arg10[%c0_37, %c0_38] : memref<12x32xf32, #tpu.memory_space<vmem>>, vector<12x32xf32>
      tpu.vector_store %arg10[%c0_37, %c0_38], %48 {strides = array<i32>} : memref<12x32xf32, #tpu.memory_space<vmem>>, vector<12x32xf32>,
      %c0_39 = arith.constant 0 : index
      %c0_40 = arith.constant 0 : index
      %50 = vector.load %arg6[%c0_39, %c0_40] : memref<48x32xf32, #tpu.memory_space<vmem>>, vector<48x32xf32>
      %cst_41 = arith.constant dense<0.000000e+00> : vector<12x32xf32>
      %51 = tpu.matmul %46, %50, %cst_41 {dimension_numbers = #tpu.dot_dimension_numbers<[1], [0], [0], [1], [0, 0, 1, 1], [], []>} : vector<12x48xf32>, vector<48x32xf32>, vector<12x32xf32> -> vector<12x32xf32>
      %c0_42 = arith.constant 0 : index
      %c0_43 = arith.constant 0 : index
      %52 = vector.load %arg11[%c0_42, %c0_43] : memref<12x32xf32, #tpu.memory_space<vmem>>, vector<12x32xf32>
      tpu.vector_store %arg11[%c0_42, %c0_43], %51 {strides = array<i32>} : memref<12x32xf32, #tpu.memory_space<vmem>>, vector<12x32xf32>,
    } else {
    }
    %c0 = arith.constant 0 : index
    %c0_1 = arith.constant 0 : index
    %c0_2 = arith.constant 0 : index
    %3 = vector.load %arg2[%c0, %c0_1, %c0_2] : memref<1x16x32xf32, #tpu.memory_space<vmem>>, vector<1x16x32xf32>
    %4 = vector.shape_cast %3 : vector<1x16x32xf32> to vector<16x32xf32>
    %c0_3 = arith.constant 0 : index
    %c0_4 = arith.constant 0 : index
    %5 = vector.load %arg4[%c0_3, %c0_4] : memref<32x32xf32, #tpu.memory_space<vmem>>, vector<32x32xf32>
    %cst = arith.constant dense<0.000000e+00> : vector<16x32xf32>
    %6 = tpu.matmul %4, %5, %cst {dimension_numbers = #tpu.dot_dimension_numbers<[1], [0], [0], [1], [0, 0, 1, 1], [], []>} : vector<16x32xf32>, vector<32x32xf32>, vector<16x32xf32> -> vector<16x32xf32>
    %7 = vector.extract_strided_slice %6 {offsets = [0, 0], sizes = [16, 16], strides = [1, 1]} : vector<16x32xf32> to vector<16x16xf32>
    %c0_5 = arith.constant 0 : index
    %c0_6 = arith.constant 0 : index
    %8 = vector.load %arg10[%c0_5, %c0_6] : memref<12x32xf32, #tpu.memory_space<vmem>>, vector<12x16xf32>
    %c0_7 = arith.constant 0 : index
    %c0_8 = arith.constant 0 : index
    %9 = vector.load %arg11[%c0_7, %c0_8] : memref<12x32xf32, #tpu.memory_space<vmem>>, vector<12x16xf32>
    %cst_9 = arith.constant dense<0.000000e+00> : vector<16x12xf32>
    %10 = tpu.matmul %7, %8, %cst_9 {dimension_numbers = #tpu.dot_dimension_numbers<[1], [1], [0], [0], [0, 0, 1, 0], [], []>} : vector<16x16xf32>, vector<12x16xf32>, vector<16x12xf32> -> vector<16x12xf32>
    %cst_10 = arith.constant dense<0xFF800000> : vector<16xf32>
    %11 = vector.multi_reduction <maximumf>, %10, %cst_10 [1] : vector<16x12xf32> to vector<16xf32>
    %12 = vector.shape_cast %11 : vector<16xf32> to vector<16x1xf32>
    %13 = vector.broadcast %12 : vector<16x1xf32> to vector<16x12xf32>
    %14 = arith.subf %10, %13 : vector<16x12xf32>
    %15 = math.exp %14 : vector<16x12xf32>
    %cst_11 = arith.constant dense<0.000000e+00> : vector<16xf32>
    %16 = vector.multi_reduction <add>, %15, %cst_11 [1] : vector<16x12xf32> to vector<16xf32>
    %17 = vector.shape_cast %16 : vector<16xf32> to vector<16x1xf32>
    %18 = vector.broadcast %17 : vector<16x1xf32> to vector<16x12xf32>
    %19 = arith.divf %15, %18 : vector<16x12xf32>
    %cst_12 = arith.constant dense<0.000000e+00> : vector<16x16xf32>
    %20 = tpu.matmul %19, %9, %cst_12 {dimension_numbers = #tpu.dot_dimension_numbers<[1], [0], [0], [1], [0, 0, 1, 1], [], []>} : vector<16x12xf32>, vector<12x16xf32>, vector<16x16xf32> -> vector<16x16xf32>
    %c0_13 = arith.constant 0 : index
    %c0_14 = arith.constant 0 : index
    %21 = vector.load %arg7[%c0_13, %c0_14] : memref<32x32xf32, #tpu.memory_space<vmem>>, vector<16x32xf32>
    %cst_15 = arith.constant dense<0.000000e+00> : vector<16x32xf32>
    %22 = tpu.matmul %20, %21, %cst_15 {dimension_numbers = #tpu.dot_dimension_numbers<[1], [0], [0], [1], [0, 0, 1, 1], [], []>} : vector<16x16xf32>, vector<16x32xf32>, vector<16x32xf32> -> vector<16x32xf32>
    %23 = vector.extract_strided_slice %6 {offsets = [0, 16], sizes = [16, 16], strides = [1, 1]} : vector<16x32xf32> to vector<16x16xf32>
    %c0_16 = arith.constant 0 : index
    %c16 = arith.constant 16 : index
    %24 = vector.load %arg10[%c0_16, %c16] : memref<12x32xf32, #tpu.memory_space<vmem>>, vector<12x16xf32>
    %c0_17 = arith.constant 0 : index
    %c16_18 = arith.constant 16 : index
    %25 = vector.load %arg11[%c0_17, %c16_18] : memref<12x32xf32, #tpu.memory_space<vmem>>, vector<12x16xf32>
    %cst_19 = arith.constant dense<0.000000e+00> : vector<16x12xf32>
    %26 = tpu.matmul %23, %24, %cst_19 {dimension_numbers = #tpu.dot_dimension_numbers<[1], [1], [0], [0], [0, 0, 1, 0], [], []>} : vector<16x16xf32>, vector<12x16xf32>, vector<16x12xf32> -> vector<16x12xf32>
    %cst_20 = arith.constant dense<0xFF800000> : vector<16xf32>
    %27 = vector.multi_reduction <maximumf>, %26, %cst_20 [1] : vector<16x12xf32> to vector<16xf32>
    %28 = vector.shape_cast %27 : vector<16xf32> to vector<16x1xf32>
    %29 = vector.broadcast %28 : vector<16x1xf32> to vector<16x12xf32>
    %30 = arith.subf %26, %29 : vector<16x12xf32>
    %31 = math.exp %30 : vector<16x12xf32>
    %cst_21 = arith.constant dense<0.000000e+00> : vector<16xf32>
    %32 = vector.multi_reduction <add>, %31, %cst_21 [1] : vector<16x12xf32> to vector<16xf32>
    %33 = vector.shape_cast %32 : vector<16xf32> to vector<16x1xf32>
    %34 = vector.broadcast %33 : vector<16x1xf32> to vector<16x12xf32>
    %35 = arith.divf %31, %34 : vector<16x12xf32>
    %cst_22 = arith.constant dense<0.000000e+00> : vector<16x16xf32>
    %36 = tpu.matmul %35, %25, %cst_22 {dimension_numbers = #tpu.dot_dimension_numbers<[1], [0], [0], [1], [0, 0, 1, 1], [], []>} : vector<16x12xf32>, vector<12x16xf32>, vector<16x16xf32> -> vector<16x16xf32>
    %c16_23 = arith.constant 16 : index
    %c0_24 = arith.constant 0 : index
    %37 = vector.load %arg7[%c16_23, %c0_24] : memref<32x32xf32, #tpu.memory_space<vmem>>, vector<16x32xf32>
    %cst_25 = arith.constant dense<0.000000e+00> : vector<16x32xf32>
    %38 = tpu.matmul %36, %37, %cst_25 {dimension_numbers = #tpu.dot_dimension_numbers<[1], [0], [0], [1], [0, 0, 1, 1], [], []>} : vector<16x16xf32>, vector<16x32xf32>, vector<16x32xf32> -> vector<16x32xf32>
    %39 = arith.addf %22, %38 : vector<16x32xf32>
    %c0_26 = arith.constant 0 : index
    %c0_27 = arith.constant 0 : index
    %40 = vector.load %arg8[%c0_26, %c0_27] : memref<1x32xf32, #tpu.memory_space<vmem>>, vector<1x32xf32>
    %41 = vector.broadcast %40 : vector<1x32xf32> to vector<16x32xf32>
    %42 = arith.addf %39, %41 : vector<16x32xf32>
    %43 = vector.shape_cast %42 : vector<16x32xf32> to vector<1x16x32xf32>
    %c0_28 = arith.constant 0 : index
    %c0_29 = arith.constant 0 : index
    %c0_30 = arith.constant 0 : index
    %44 = vector.load %arg9[%c0_28, %c0_29, %c0_30] : memref<1x16x32xf32, #tpu.memory_space<vmem>>, vector<1x16x32xf32>
    tpu.vector_store %arg9[%c0_28, %c0_29, %c0_30], %43 {strides = array<i32>} : memref<1x16x32xf32, #tpu.memory_space<vmem>>, vector<1x16x32xf32>,
    return
  }
  func.func @transform_0(%arg0: i32, %arg1: i32) -> (i32, i32, i32) {
    %c0_i32 = arith.constant 0 : i32
    %c0_i32_0 = arith.constant 0 : i32
    return %arg0, %arg1, %c0_i32 : i32, i32, i32
  }
  func.func @transform_1(%arg0: i32, %arg1: i32) -> (i32, i32, i32) {
    %c0_i32 = arith.constant 0 : i32
    %c0_i32_0 = arith.constant 0 : i32
    %c0_i32_1 = arith.constant 0 : i32
    return %arg0, %c0_i32, %c0_i32_0 : i32, i32, i32
  }
  func.func @transform_2(%arg0: i32, %arg1: i32) -> (i32, i32) {
    %c0_i32 = arith.constant 0 : i32
    %c0_i32_0 = arith.constant 0 : i32
    %c0_i32_1 = arith.constant 0 : i32
    return %c0_i32, %c0_i32_0 : i32, i32
  }
  func.func @transform_3(%arg0: i32, %arg1: i32) -> (i32, i32) {
    %c0_i32 = arith.constant 0 : i32
    %c0_i32_0 = arith.constant 0 : i32
    %c0_i32_1 = arith.constant 0 : i32
    return %c0_i32, %c0_i32_0 : i32, i32
  }
  func.func @transform_4(%arg0: i32, %arg1: i32) -> (i32, i32) {
    %c0_i32 = arith.constant 0 : i32
    %c0_i32_0 = arith.constant 0 : i32
    %c0_i32_1 = arith.constant 0 : i32
    return %c0_i32, %c0_i32_0 : i32, i32
  }
  func.func @transform_5(%arg0: i32, %arg1: i32) -> (i32, i32) {
    %c0_i32 = arith.constant 0 : i32
    %c0_i32_0 = arith.constant 0 : i32
    %c0_i32_1 = arith.constant 0 : i32
    return %c0_i32, %c0_i32_0 : i32, i32
  }
  func.func @transform_6(%arg0: i32, %arg1: i32) -> (i32, i32) {
    %c0_i32 = arith.constant 0 : i32
    %c0_i32_0 = arith.constant 0 : i32
    %c0_i32_1 = arith.constant 0 : i32
    return %c0_i32, %c0_i32_0 : i32, i32
  }
  func.func @transform_7(%arg0: i32, %arg1: i32) -> (i32, i32, i32) {
    %c0_i32 = arith.constant 0 : i32
    %c0_i32_0 = arith.constant 0 : i32
    return %arg0, %arg1, %c0_i32 : i32, i32, i32
  }
}

</mosaic_0001>

<llo_original>
// kernel: tpu_custom_call.1
$region0: #{tpu_custom_call.1}
  #allocation0 [shape = 'u32[]', space=smem, size = 0x4, offset = 0x4, fixed_abs, tag = 'smem constant byte address 0x4 - core index']
  #allocation1 [shape = 'u32[144,128]{1,0:T(1,128)}', space=vmem, size = 0x12000, scoped, tag = 'internal scratch']
  #allocation2 [shape = 'f32[12,32]{1,0:T(8,128)}', space=vmem, size = 0x2000, scoped, tag = 'scratch operand']
  #allocation3 [shape = 'f32[12,32]{1,0:T(8,128)}', space=vmem, size = 0x2000, scoped, tag = 'scratch operand']
  %s0 = inlined_call_operand.vmem [shape: f32[2,16,32], index: 0, kind: input, shape index: {}]
  %s1 = inlined_call_operand.vmem [shape: f32[2,12,48], index: 1, kind: input, shape index: {}]
  %s2 = inlined_call_operand.vmem [shape: f32[32,32], index: 2, kind: input, shape index: {}]
  %s3 = inlined_call_operand.vmem [shape: f32[48,32], index: 3, kind: input, shape index: {}]
  %s4 = inlined_call_operand.vmem [shape: f32[48,32], index: 4, kind: input, shape index: {}]
  %s5 = inlined_call_operand.vmem [shape: f32[32,32], index: 5, kind: input, shape index: {}]
  %s6 = inlined_call_operand.vmem [shape: f32[1,32], index: 6, kind: input, shape index: {}]
  %s7 = inlined_call_operand.hbm [shape: f32[2,16,32], index: 7, kind: output, shape index: {}]
  %s8 = sld [smem:[#allocation0]]
  $region65: #{tpu_custom_call.1} parent=0
    _
  %s10 = ssub.s32 1, %s8
  %s11 = scalar_select 0, %s10, %s8
  $region1: #{tpu_custom_call.1} parent=0
    #allocation4 [shape = 'u8[16384]{0}', space=vmem, size = 0x4000, scoped, tag = 'output window, operand 0']
    #allocation5 [shape = 's32[2]{0}', space=sflag, size = 0x8, scoped, tag = 'scoped memory for tpu_custom_call.1']
    %12 = vsyncpa [#allocation5], 0
    %s13 = scalar_lea.sflag [#allocation5], 1
    %14 = vsyncpa %s13, 0
    loop: start=0, step=1, limit=4
    $region2: #{tpu_custom_call.1} parent=1 // loop_pre_header
      _
    $region3: #{tpu_custom_call.1} parent=1 // loop_header
      %s16 = sphi 0, %s20
      %p17 = scmp.ge.s32.totalorder %s16, 4
      %s23 = sphi 0, %s35
      %s24 = sphi 0, %s31
      %s25 = sphi 0, %s23
      %s26 = sphi 0, %s24
      %s27 = sphi 0, %s25
      %s28 = sphi 0, %s26
      %s40 = sphi 0, %s42
      %s43 = sphi 0, %s40
      %s44 = sphi 0, %s43
      %s60 = sphi 0, %s44
      %s66 = sphi 0, %s68
      %s69 = sphi 0, %s66
      %s70 = sphi 0, %s69
      %s86 = sphi 0, %s70
      %s90 = sphi 0, %s90
      %s92 = sphi 0, %s90
      %s93 = sphi 0, %s92
      %s107 = sphi 0, %s93
      %s111 = sphi 0, %s111
      %s113 = sphi 0, %s111
      %s114 = sphi 0, %s113
      %s128 = sphi 0, %s114
      %s132 = sphi 0, %s132
      %s134 = sphi 0, %s132
      %s135 = sphi 0, %s134
      %s149 = sphi 0, %s135
      %s153 = sphi 0, %s153
      %s155 = sphi 0, %s153
      %s156 = sphi 0, %s155
      %s170 = sphi 0, %s156
      %s174 = sphi 0, %s174
      %s176 = sphi 0, %s174
      %s177 = sphi 0, %s176
      %s191 = sphi 0, %s177
      %s199 = sphi 0, %s201
      %s202 = sphi 0, %s199
      %s203 = sphi 0, %s202
      %s219 = sphi 0, %s203
    $region4: #{tpu_custom_call.1} parent=1 // loop_header_branch
      %19 = sbr.rel (%p17) target = $region8
    $region5: #{tpu_custom_call.1} parent=1 // loop_body
      %s21 = ssub.s32 %s16, 1
      %s22 = ssub.s32 %s16, 2
      %s29 = sadd.s32 1, %s24
      %p30 = scmp.ge.s32.totalorder %s29, 1
      %s31 = scalar_select %p30, 0, %s29
      %s32 = sadd.s32 1, %s23
      %s33 = scalar_select %p30, %s32, %s23
      %p34 = scmp.ge.s32.totalorder %s33, 2
      %s35 = scalar_select %p34, 0, %s33
      %s36 = ssub.s32 %s23, %s35
      %s37 = ssub.s32 %s24, %s31
      %s38 = sor.u32 %s36, %s37
      %p39 = scmp.eq.s32.totalorder %s38, 0
      %s41 = sadd.s32 %s40, 1
      %s42 = scalar_select %p39, %s40, %s41
      %p45 = pneg %p39
      %p46 = scmp.eq.s32.totalorder %s16, 1
      %p47 = por %p45, %p46
      %p48 = scmp.ne.s32.totalorder %s40, %s43
      %p49 = scmp.eq.s32.totalorder %s16, 0
      %p50 = por %p48, %p49
      %p51 = scmp.ne.s32.totalorder %s40, %s43
      %p52 = scmp.eq.s32.totalorder %s21, 1
      %p53 = por %p51, %p52
      %p54 = scmp.ne.s32.totalorder %s43, %s44
      %p55 = scmp.eq.s32.totalorder %s21, 0
      %p56 = por %p54, %p55
      %p57 = scmp.ne.s32.totalorder %s43, %s44
      %p58 = scmp.eq.s32.totalorder %s22, 1
      %p59 = por %p57, %p58
      %p61 = scmp.ne.s32.totalorder %s44, %s60
      %p62 = scmp.eq.s32.totalorder %s22, 0
      %p63 = por %p61, %p62
      %s64 = ssub.s32 %s23, %s35
      %p65 = scmp.eq.s32.totalorder %s64, 0
      %s67 = sadd.s32 %s66, 1
      %s68 = scalar_select %p65, %s66, %s67
      %p71 = pneg %p65
      %p72 = scmp.eq.s32.totalorder %s16, 1
      %p73 = por %p71, %p72
      %p74 = scmp.ne.s32.totalorder %s66, %s69
      %p75 = scmp.eq.s32.totalorder %s16, 0
      %p76 = por %p74, %p75
      %p77 = scmp.ne.s32.totalorder %s66, %s69
      %p78 = scmp.eq.s32.totalorder %s21, 1
      %p79 = por %p77, %p78
      %p80 = scmp.ne.s32.totalorder %s69, %s70
      %p81 = scmp.eq.s32.totalorder %s21, 0
      %p82 = por %p80, %p81
      %p83 = scmp.ne.s32.totalorder %s69, %s70
      %p84 = scmp.eq.s32.totalorder %s22, 1
      %p85 = por %p83, %p84
      %p87 = scmp.ne.s32.totalorder %s70, %s86
      %p88 = scmp.eq.s32.totalorder %s22, 0
      %p89 = por %p87, %p88
      %s91 = sadd.s32 %s90, 1
      %p94 = scmp.eq.s32.totalorder %s16, 1
      %p95 = scmp.ne.s32.totalorder %s90, %s92
      %p96 = scmp.eq.s32.totalorder %s16, 0
      %p97 = por %p95, %p96
      %p98 = scmp.ne.s32.totalorder %s90, %s92
      %p99 = scmp.eq.s32.totalorder %s21, 1
      %p100 = por %p98, %p99
      %p101 = scmp.ne.s32.totalorder %s92, %s93
      %p102 = scmp.eq.s32.totalorder %s21, 0
      %p103 = por %p101, %p102
      %p104 = scmp.ne.s32.totalorder %s92, %s93
      %p105 = scmp.eq.s32.totalorder %s22, 1
      %p106 = por %p104, %p105
      %p108 = scmp.ne.s32.totalorder %s93, %s107
      %p109 = scmp.eq.s32.totalorder %s22, 0
      %p110 = por %p108, %p109
      %s112 = sadd.s32 %s111, 1
      %p115 = scmp.eq.s32.totalorder %s16, 1
      %p116 = scmp.ne.s32.totalorder %s111, %s113
      %p117 = scmp.eq.s32.totalorder %s16, 0
      %p118 = por %p116, %p117
      %p119 = scmp.ne.s32.totalorder %s111, %s113
      %p120 = scmp.eq.s32.totalorder %s21, 1
      %p121 = por %p119, %p120
      %p122 = scmp.ne.s32.totalorder %s113, %s114
      %p123 = scmp.eq.s32.totalorder %s21, 0
      %p124 = por %p122, %p123
      %p125 = scmp.ne.s32.totalorder %s113, %s114
      %p126 = scmp.eq.s32.totalorder %s22, 1
      %p127 = por %p125, %p126
      %p129 = scmp.ne.s32.totalorder %s114, %s128
      %p130 = scmp.eq.s32.totalorder %s22, 0
      %p131 = por %p129, %p130
      %s133 = sadd.s32 %s132, 1
      %p136 = scmp.eq.s32.totalorder %s16, 1
      %p137 = scmp.ne.s32.totalorder %s132, %s134
      %p138 = scmp.eq.s32.totalorder %s16, 0
      %p139 = por %p137, %p138
      %p140 = scmp.ne.s32.totalorder %s132, %s134
      %p141 = scmp.eq.s32.totalorder %s21, 1
      %p142 = por %p140, %p141
      %p143 = scmp.ne.s32.totalorder %s134, %s135
      %p144 = scmp.eq.s32.totalorder %s21, 0
      %p145 = por %p143, %p144
      %p146 = scmp.ne.s32.totalorder %s134, %s135
      %p147 = scmp.eq.s32.totalorder %s22, 1
      %p148 = por %p146, %p147
      %p150 = scmp.ne.s32.totalorder %s135, %s149
      %p151 = scmp.eq.s32.totalorder %s22, 0
      %p152 = por %p150, %p151
      %s154 = sadd.s32 %s153, 1
      %p157 = scmp.eq.s32.totalorder %s16, 1
      %p158 = scmp.ne.s32.totalorder %s153, %s155
      %p159 = scmp.eq.s32.totalorder %s16, 0
      %p160 = por %p158, %p159
      %p161 = scmp.ne.s32.totalorder %s153, %s155
      %p162 = scmp.eq.s32.totalorder %s21, 1
      %p163 = por %p161, %p162
      %p164 = scmp.ne.s32.totalorder %s155, %s156
      %p165 = scmp.eq.s32.totalorder %s21, 0
      %p166 = por %p164, %p165
      %p167 = scmp.ne.s32.totalorder %s155, %s156
      %p168 = scmp.eq.s32.totalorder %s22, 1
      %p169 = por %p167, %p168
      %p171 = scmp.ne.s32.totalorder %s156, %s170
      %p172 = scmp.eq.s32.totalorder %s22, 0
      %p173 = por %p171, %p172
      %s175 = sadd.s32 %s174, 1
      %p178 = scmp.eq.s32.totalorder %s16, 1
      %p179 = scmp.ne.s32.totalorder %s174, %s176
      %p180 = scmp.eq.s32.totalorder %s16, 0
      %p181 = por %p179, %p180
      %p182 = scmp.ne.s32.totalorder %s174, %s176
      %p183 = scmp.eq.s32.totalorder %s21, 1
      %p184 = por %p182, %p183
      %p185 = scmp.ne.s32.totalorder %s176, %s177
      %p186 = scmp.eq.s32.totalorder %s21, 0
      %p187 = por %p185, %p186
      %p188 = scmp.ne.s32.totalorder %s176, %s177
      %p189 = scmp.eq.s32.totalorder %s22, 1
      %p190 = por %p188, %p189
      %p192 = scmp.ne.s32.totalorder %s177, %s191
      %p193 = scmp.eq.s32.totalorder %s22, 0
      %p194 = por %p192, %p193
      %s195 = ssub.s32 %s23, %s35
      %s196 = ssub.s32 %s24, %s31
      %s197 = sor.u32 %s195, %s196
      %p198 = scmp.eq.s32.totalorder %s197, 0
      %s200 = sadd.s32 %s199, 1
      %s201 = scalar_select %p198, %s199, %s200
      %p204 = pneg %p198
      %p205 = scmp.eq.s32.totalorder %s16, 1
      %p206 = por %p204, %p205
      %p207 = scmp.ne.s32.totalorder %s199, %s202
      %p208 = scmp.eq.s32.totalorder %s16, 0
      %p209 = por %p207, %p208
      %p210 = scmp.ne.s32.totalorder %s199, %s202
      %p211 = scmp.eq.s32.totalorder %s21, 1
      %p212 = por %p210, %p211
      %p213 = scmp.ne.s32.totalorder %s202, %s203
      %p214 = scmp.eq.s32.totalorder %s21, 0
      %p215 = por %p213, %p214
      %p216 = scmp.ne.s32.totalorder %s202, %s203
      %p217 = scmp.eq.s32.totalorder %s22, 1
      %p218 = por %p216, %p217
      %p220 = scmp.ne.s32.totalorder %s203, %s219
      %p221 = scmp.eq.s32.totalorder %s22, 0
      %p222 = por %p220, %p221
      %p223 = scmp.le.s32.totalorder 1, %s16
      %p224 = scmp.lt.s32.totalorder %s16, 3
      %p225 = pnand %p223, %p224
      %p226 = pneg %p225
      // Predicated region
      $region9: #{tpu_custom_call.1} parent=5 // pred_check
        _
      $region10: #{tpu_custom_call.1} parent=5 // pred_check_branch
        %228 = sbr.rel (%p225) target = $region12
      $region11: #{tpu_custom_call.1} parent=5 // pred_region
        %s229 = ssub.s32 %s16, 1
        // Predicated region
        $region13: #{tpu_custom_call.1} parent=11 // pred_check
          %p230 = pneg %p103
        $region14: #{tpu_custom_call.1} parent=11 // pred_check_branch
          %232 = sbr.rel (%p230) target = $region16
        $region15: #{tpu_custom_call.1} parent=11 // pred_region
          _
        $region16: #{tpu_custom_call.1} parent=11 // pred_fallthru
          _
        // Predicated region
        $region17: #{tpu_custom_call.1} parent=11 // pred_check
          %p233 = pneg %p124
        $region18: #{tpu_custom_call.1} parent=11 // pred_check_branch
          %235 = sbr.rel (%p233) target = $region20
        $region19: #{tpu_custom_call.1} parent=11 // pred_region
          _
        $region20: #{tpu_custom_call.1} parent=11 // pred_fallthru
          _
        // Predicated region
        $region21: #{tpu_custom_call.1} parent=11 // pred_check
          %p236 = pneg %p145
        $region22: #{tpu_custom_call.1} parent=11 // pred_check_branch
          %238 = sbr.rel (%p236) target = $region24
        $region23: #{tpu_custom_call.1} parent=11 // pred_region
          _
        $region24: #{tpu_custom_call.1} parent=11 // pred_fallthru
          _
        // Predicated region
        $region25: #{tpu_custom_call.1} parent=11 // pred_check
          %p239 = pneg %p166
        $region26: #{tpu_custom_call.1} parent=11 // pred_check_branch
          %241 = sbr.rel (%p239) target = $region28
        $region27: #{tpu_custom_call.1} parent=11 // pred_region
          _
        $region28: #{tpu_custom_call.1} parent=11 // pred_fallthru
          _
        // Predicated region
        $region29: #{tpu_custom_call.1} parent=11 // pred_check
          %p242 = pneg %p187
        $region30: #{tpu_custom_call.1} parent=11 // pred_check_branch
          %244 = sbr.rel (%p242) target = $region32
        $region31: #{tpu_custom_call.1} parent=11 // pred_region
          _
        $region32: #{tpu_custom_call.1} parent=11 // pred_fallthru
          _
      $region12: #{tpu_custom_call.1} parent=5 // pred_fallthru
        _
      %p245 = scmp.lt.s32.totalorder %s16, 2
      // Predicated region
      $region33: #{tpu_custom_call.1} parent=5 // pred_check
        %p246 = pneg %p245
      $region34: #{tpu_custom_call.1} parent=5 // pred_check_branch
        %248 = sbr.rel (%p246) target = $region36
      $region35: #{tpu_custom_call.1} parent=5 // pred_region
        // Predicated region
        $region37: #{tpu_custom_call.1} parent=35 // pred_check
          %p249 = pneg %p50
        $region38: #{tpu_custom_call.1} parent=35 // pred_check_branch
          %251 = sbr.rel (%p249) target = $region40
        $region39: #{tpu_custom_call.1} parent=35 // pred_region
          %s252 = smul.u32 2, %s24
          %p253 = scmp.lt.s32.totalorder %s23, 1
          %s254 = scalar_select %p253, %s23, 1
          %p255 = scmp.lt.s32.totalorder %s252, 1
          %s256 = scalar_select %p255, %s252, 1
          %s257 = smul.addr %s254, 2
          %s258 = sadd.s32 %s256, %s257
          %s259 = smul.addr %s258, 8
          %s260 = scalar_lea.vmem %s0, %s259
          %s261 = smul.u32 2, %s24
        $region40: #{tpu_custom_call.1} parent=35 // pred_fallthru
          _
        // Predicated region
        $region41: #{tpu_custom_call.1} parent=35 // pred_check
          %p262 = pneg %p76
        $region42: #{tpu_custom_call.1} parent=35 // pred_check_branch
          %264 = sbr.rel (%p262) target = $region44
        $region43: #{tpu_custom_call.1} parent=35 // pred_region
          %p265 = scmp.lt.s32.totalorder %s23, 1
          %s266 = scalar_select %p265, %s23, 1
          %s267 = smul.addr %s266, 2
          %s268 = smul.addr %s267, 8
          %s269 = scalar_lea.vmem %s1, %s268
        $region44: #{tpu_custom_call.1} parent=35 // pred_fallthru
          _
      $region36: #{tpu_custom_call.1} parent=5 // pred_fallthru
        _
      %p270 = scmp.le.s32.totalorder 1, %s16
      %p271 = scmp.lt.s32.totalorder %s16, 3
      %p272 = pnand %p270, %p271
      %p273 = pneg %p272
      // Predicated region
      $region45: #{tpu_custom_call.1} parent=5 // pred_check
        _
      $region46: #{tpu_custom_call.1} parent=5 // pred_check_branch
        %275 = sbr.rel (%p272) target = $region48
      $region47: #{tpu_custom_call.1} parent=5 // pred_region
        %s276 = ssub.s32 %s16, 1
        %s277 = smul.u32 2, %s26
        %p278 = scmp.lt.s32.totalorder %s25, 1
        %s279 = scalar_select %p278, %s25, 1
        %p280 = scmp.lt.s32.totalorder %s277, 1
        %s281 = scalar_select %p280, %s277, 1
        %s282 = smul.addr %s279, 2
        %s283 = sadd.s32 %s281, %s282
        %s284 = smul.addr %s283, 8
        %s285 = scalar_lea.vmem %s0, %s284
        %p286 = pneg %p56
        %p287 = pneg %p53
        %p288 = scmp.lt.s32.totalorder %s25, 1
        %s289 = scalar_select %p288, %s25, 1
        %s290 = smul.addr %s289, 2
        %s291 = smul.addr %s290, 8
        %s292 = scalar_lea.vmem %s1, %s291
        %p293 = pneg %p82
        %p294 = pneg %p79
        %p295 = pneg %p103
        %p296 = pneg %p100
        %p297 = pneg %p124
        %p298 = pneg %p121
        %p299 = pneg %p145
        %p300 = pneg %p142
        %p301 = pneg %p166
        %p302 = pneg %p163
        %p303 = pneg %p187
        %p304 = pneg %p184
        %p305 = pneg %p215
        %p306 = pneg %p212
        %s307 = sand.u32 %s202, 1
        %s308 = scalar_lea.sflag [#allocation5], %s307
        %s309 = sand.u32 %s202, 1
        %s310 = smul.addr %s309, 16
        %s311 = scalar_lea.vmem [#allocation4], %s310
        %s312 = smul.u32 2, %s26
        %p313 = scmp.lt.s32.totalorder %s25, 1
        %s314 = scalar_select %p313, %s25, 1
        %p315 = scmp.lt.s32.totalorder %s312, 1
        %s316 = scalar_select %p315, %s312, 1
        %s317 = smul.addr %s314, 2
        %s318 = sadd.s32 %s316, %s317
        %s319 = smul.addr %s318, 8
        %s320 = scalar_lea.vmem %s0, %s319
        %s321 = smul.u32 2, %s26
        %p322 = scmp.lt.s32.totalorder %s25, 1
        %s323 = scalar_select %p322, %s25, 1
        %s324 = smul.addr %s323, 2
        %s325 = smul.addr %s324, 8
        %s326 = scalar_lea.vmem %s1, %s325
        %s327 = smul.u32 2, %s26
        %p328 = scmp.eq.s32.totalorder %s26, 0
        // Predicated region
        $region49: #{tpu_custom_call.1} parent=47 // pred_check
          %p329 = pneg %p328
        $region50: #{tpu_custom_call.1} parent=47 // pred_check_branch
          %331 = sbr.rel (%p329) target = $region52
        $region51: #{tpu_custom_call.1} parent=47 // pred_region
          %v332 = vld [vmem:[%s326] sm:$0xff]
          %v333 = vld [vmem:[%s326 + $0x8] sm:$0xf]
          %v334 = vld [vmem:[%s3] sm:$0xff]
          %v335 = vld [vmem:[%s3 + $0x8] sm:$0xff]
          %v336 = vld [vmem:[%s3 + $0x10] sm:$0xff]
          %v337 = vld [vmem:[%s3 + $0x18] sm:$0xff]
          %v338 = vld [vmem:[%s3 + $0x20] sm:$0xff]
          %v339 = vld [vmem:[%s3 + $0x28] sm:$0xff]
          %vm340 = vcmask 392192
          %v342 = vsel %vm340, %v332, 0
          %v345 = vsel %vm340, %v333, 0
          %347 = vmatprep.subr.mxu0 0.0
          %348 = vmatpush1.msra.mxu0 0.0
          %349 = vmatprep.subr.mxu0 0.0
          %350 = vmatpush1.msra.mxu0 0.0
          %351 = vmatprep.subr.mxu0 0.0
          %352 = vmatpush1.msra.mxu0 0.0
          %353 = vmatprep.subr.mxu0 0.0
          %354 = vmatpush1.msra.mxu0 0.0
          %355 = vmatprep.subr.mxu0 0.0
          %356 = vmatpush1.msra.mxu0 0.0
          %357 = vmatprep.subr.mxu0 0.0
          %358 = vmatpush1.msra.mxu0 0.0
          %359 = vmatprep.subr.mxu0 0.0
          %360 = vmatpush1.msra.mxu0 0.0
          %361 = vmatprep.subr.mxu0 0.0
          %362 = vmatpush1.msra.mxu0 0.0
          %363 = vmatprep.subr.mxu0 0.0
          %364 = vmatpush1.msra.mxu0 0.0
          %365 = vmatprep.subr.mxu0 0.0
          %366 = vmatpush1.msra.mxu0 0.0
          %367 = vmatprep.subr.mxu0 0.0
          %368 = vmatpush1.msra.mxu0 %v339
          %369 = vmatprep.subr.mxu0 0.0
          %370 = vmatpush1.msra.mxu0 %v338
          %371 = vmatprep.subr.mxu0 0.0
          %372 = vmatpush1.msra.mxu0 %v337
          %373 = vmatprep.subr.mxu0 0.0
          %374 = vmatpush1.msra.mxu0 %v336
          %375 = vmatprep.subr.mxu0 0.0
          %376 = vmatpush1.msra.mxu0 %v335
          %377 = vmatprep.subr.mxu0 0.0
          %378 = vmatpush1.msra.mxu0 %v334
          %379 = vmatprep.subr.mxu0 0.0
          %380 = vmatpush2.msra.mxu0 0.0
          %381 = vmatprep.subr.mxu0 0.0
          %382 = vmatpush2.msra.mxu0 0.0
          %383 = vmatprep.subr.mxu0 0.0
          %384 = vmatpush2.msra.mxu0 0.0
          %385 = vmatprep.subr.mxu0 0.0
          %386 = vmatpush2.msra.mxu0 0.0
          %387 = vmatprep.subr.mxu0 0.0
          %388 = vmatpush2.msra.mxu0 0.0
          %389 = vmatprep.subr.mxu0 0.0
          %390 = vmatpush2.msra.mxu0 0.0
          %391 = vmatprep.subr.mxu0 0.0
          %392 = vmatpush2.msra.mxu0 0.0
          %393 = vmatprep.subr.mxu0 0.0
          %394 = vmatpush2.msra.mxu0 0.0
          %395 = vmatprep.subr.mxu0 0.0
          %396 = vmatpush2.msra.mxu0 0.0
          %397 = vmatprep.subr.mxu0 0.0
          %398 = vmatpush2.msra.mxu0 0.0
          %399 = vmatprep.subr.mxu0 0.0
          %400 = vmatpush2.msra.mxu0 0.0
          %401 = vmatprep.subr.mxu0 0.0
          %402 = vmatpush2.msra.mxu0 0.0
          %403 = vmatprep.subr.mxu0 0.0
          %404 = vmatpush2.msra.mxu0 0.0
          %405 = vmatprep.subr.mxu0 0.0
          %406 = vmatpush2.msra.mxu0 0.0
          %407 = vmatprep.subr.mxu0 0.0
          %408 = vmatpush2.msra.mxu0 0.0
          %409 = vmatprep.subr.mxu0 0.0
          %410 = vmatpush2.msra.mxu0 0.0
          %411 = vmatprep.mubr.f32.mxu0 0.0
          %412 = vmatmul.mubr.f32.gmra.mxu0 %v342
          %v413 = vpop.f32.mrf.mxu0
          %v414 = vadd.f32 0.0, %v413
          %v415 = vpop.f32.mrf.mxu0
          %416 = vmatprep.mubr.f32.mxu0 0.0
          %417 = vmatmul.mubr.f32.gmra.mxu0 %v345
          %v418 = vpop.f32.mrf.mxu0
          %v419 = vadd.f32 0.0, %v418
          %v420 = vpop.f32.mrf.mxu0
          %421 = vdwg.mxu0
          %vm422 = vcmask 261120
          %423 = vst.msk [vmem:[#allocation2] sm:$0xff] %vm422, %v414
          %vm424 = vcmask 257024
          %425 = vst.msk [vmem:[#allocation2 + $0x8] sm:$0xf] %vm424, %v419
          %v426 = vld [vmem:[%s4] sm:$0xff]
          %v427 = vld [vmem:[%s4 + $0x8] sm:$0xff]
          %v428 = vld [vmem:[%s4 + $0x10] sm:$0xff]
          %v429 = vld [vmem:[%s4 + $0x18] sm:$0xff]
          %v430 = vld [vmem:[%s4 + $0x20] sm:$0xff]
          %v431 = vld [vmem:[%s4 + $0x28] sm:$0xff]
          %432 = vmatprep.subr.mxu0 0.0
          %433 = vmatpush1.msra.mxu0 0.0
          %434 = vmatprep.subr.mxu0 0.0
          %435 = vmatpush1.msra.mxu0 0.0
          %436 = vmatprep.subr.mxu0 0.0
          %437 = vmatpush1.msra.mxu0 0.0
          %438 = vmatprep.subr.mxu0 0.0
          %439 = vmatpush1.msra.mxu0 0.0
          %440 = vmatprep.subr.mxu0 0.0
          %441 = vmatpush1.msra.mxu0 0.0
          %442 = vmatprep.subr.mxu0 0.0
          %443 = vmatpush1.msra.mxu0 0.0
          %444 = vmatprep.subr.mxu0 0.0
          %445 = vmatpush1.msra.mxu0 0.0
          %446 = vmatprep.subr.mxu0 0.0
          %447 = vmatpush1.msra.mxu0 0.0
          %448 = vmatprep.subr.mxu0 0.0
          %449 = vmatpush1.msra.mxu0 0.0
          %450 = vmatprep.subr.mxu0 0.0
          %451 = vmatpush1.msra.mxu0 0.0
          %452 = vmatprep.subr.mxu0 0.0
          %453 = vmatpush1.msra.mxu0 %v431
          %454 = vmatprep.subr.mxu0 0.0
          %455 = vmatpush1.msra.mxu0 %v430
          %456 = vmatprep.subr.mxu0 0.0
          %457 = vmatpush1.msra.mxu0 %v429
          %458 = vmatprep.subr.mxu0 0.0
          %459 = vmatpush1.msra.mxu0 %v428
          %460 = vmatprep.subr.mxu0 0.0
          %461 = vmatpush1.msra.mxu0 %v427
          %462 = vmatprep.subr.mxu0 0.0
          %463 = vmatpush1.msra.mxu0 %v426
          %464 = vmatprep.subr.mxu0 0.0
          %465 = vmatpush2.msra.mxu0 0.0
          %466 = vmatprep.subr.mxu0 0.0
          %467 = vmatpush2.msra.mxu0 0.0
          %468 = vmatprep.subr.mxu0 0.0
          %469 = vmatpush2.msra.mxu0 0.0
          %470 = vmatprep.subr.mxu0 0.0
          %471 = vmatpush2.msra.mxu0 0.0
          %472 = vmatprep.subr.mxu0 0.0
          %473 = vmatpush2.msra.mxu0 0.0
          %474 = vmatprep.subr.mxu0 0.0
          %475 = vmatpush2.msra.mxu0 0.0
          %476 = vmatprep.subr.mxu0 0.0
          %477 = vmatpush2.msra.mxu0 0.0
          %478 = vmatprep.subr.mxu0 0.0
          %479 = vmatpush2.msra.mxu0 0.0
          %480 = vmatprep.subr.mxu0 0.0
          %481 = vmatpush2.msra.mxu0 0.0
          %482 = vmatprep.subr.mxu0 0.0
          %483 = vmatpush2.msra.mxu0 0.0
          %484 = vmatprep.subr.mxu0 0.0
          %485 = vmatpush2.msra.mxu0 0.0
          %486 = vmatprep.subr.mxu0 0.0
          %487 = vmatpush2.msra.mxu0 0.0
          %488 = vmatprep.subr.mxu0 0.0
          %489 = vmatpush2.msra.mxu0 0.0
          %490 = vmatprep.subr.mxu0 0.0
          %491 = vmatpush2.msra.mxu0 0.0
          %492 = vmatprep.subr.mxu0 0.0
          %493 = vmatpush2.msra.mxu0 0.0
          %494 = vmatprep.subr.mxu0 0.0
          %495 = vmatpush2.msra.mxu0 0.0
          %496 = vmatprep.mubr.f32.mxu0 0.0
          %497 = vmatmul.mubr.f32.gmra.mxu0 %v342
          %v498 = vpop.f32.mrf.mxu0
          %v499 = vadd.f32 0.0, %v498
          %v500 = vpop.f32.mrf.mxu0
          %501 = vmatprep.mubr.f32.mxu0 0.0
          %502 = vmatmul.mubr.f32.gmra.mxu0 %v345
          %v503 = vpop.f32.mrf.mxu0
          %v504 = vadd.f32 0.0, %v503
          %v505 = vpop.f32.mrf.mxu0
          %506 = vdwg.mxu0
          %507 = vst.msk [vmem:[#allocation3] sm:$0xff] %vm422, %v499
          %508 = vst.msk [vmem:[#allocation3 + $0x8] sm:$0xf] %vm424, %v504
        $region52: #{tpu_custom_call.1} parent=47 // pred_fallthru
          _
        %v509 = vld [vmem:[%s320] sm:$0xff]
        %v510 = vld [vmem:[%s320 + $0x8] sm:$0xff]
        %v511 = vld [vmem:[%s2] sm:$0xff]
        %v512 = vld [vmem:[%s2 + $0x8] sm:$0xff]
        %v513 = vld [vmem:[%s2 + $0x10] sm:$0xff]
        %v514 = vld [vmem:[%s2 + $0x18] sm:$0xff]
        %vm515 = vcmask 261120
        %v517 = vsel %vm515, %v509, 0
        %v520 = vsel %vm515, %v510, 0
        %522 = vmatprep.subr.mxu0 0.0
        %523 = vmatpush1.msra.mxu0 0.0
        %524 = vmatprep.subr.mxu0 0.0
        %525 = vmatpush1.msra.mxu0 0.0
        %526 = vmatprep.subr.mxu0 0.0
        %527 = vmatpush1.msra.mxu0 0.0
        %528 = vmatprep.subr.mxu0 0.0
        %529 = vmatpush1.msra.mxu0 0.0
        %530 = vmatprep.subr.mxu0 0.0
        %531 = vmatpush1.msra.mxu0 0.0
        %532 = vmatprep.subr.mxu0 0.0
        %533 = vmatpush1.msra.mxu0 0.0
        %534 = vmatprep.subr.mxu0 0.0
        %535 = vmatpush1.msra.mxu0 0.0
        %536 = vmatprep.subr.mxu0 0.0
        %537 = vmatpush1.msra.mxu0 0.0
        %538 = vmatprep.subr.mxu0 0.0
        %539 = vmatpush1.msra.mxu0 0.0
        %540 = vmatprep.subr.mxu0 0.0
        %541 = vmatpush1.msra.mxu0 0.0
        %542 = vmatprep.subr.mxu0 0.0
        %543 = vmatpush1.msra.mxu0 0.0
        %544 = vmatprep.subr.mxu0 0.0
        %545 = vmatpush1.msra.mxu0 0.0
        %546 = vmatprep.subr.mxu0 0.0
        %547 = vmatpush1.msra.mxu0 %v514
        %548 = vmatprep.subr.mxu0 0.0
        %549 = vmatpush1.msra.mxu0 %v513
        %550 = vmatprep.subr.mxu0 0.0
        %551 = vmatpush1.msra.mxu0 %v512
        %552 = vmatprep.subr.mxu0 0.0
        %553 = vmatpush1.msra.mxu0 %v511
        %554 = vmatprep.subr.mxu0 0.0
        %555 = vmatpush2.msra.mxu0 0.0
        %556 = vmatprep.subr.mxu0 0.0
        %557 = vmatpush2.msra.mxu0 0.0
        %558 = vmatprep.subr.mxu0 0.0
        %559 = vmatpush2.msra.mxu0 0.0
        %560 = vmatprep.subr.mxu0 0.0
        %561 = vmatpush2.msra.mxu0 0.0
        %562 = vmatprep.subr.mxu0 0.0
        %563 = vmatpush2.msra.mxu0 0.0
        %564 = vmatprep.subr.mxu0 0.0
        %565 = vmatpush2.msra.mxu0 0.0
        %566 = vmatprep.subr.mxu0 0.0
        %567 = vmatpush2.msra.mxu0 0.0
        %568 = vmatprep.subr.mxu0 0.0
        %569 = vmatpush2.msra.mxu0 0.0
        %570 = vmatprep.subr.mxu0 0.0
        %571 = vmatpush2.msra.mxu0 0.0
        %572 = vmatprep.subr.mxu0 0.0
        %573 = vmatpush2.msra.mxu0 0.0
        %574 = vmatprep.subr.mxu0 0.0
        %575 = vmatpush2.msra.mxu0 0.0
        %576 = vmatprep.subr.mxu0 0.0
        %577 = vmatpush2.msra.mxu0 0.0
        %578 = vmatprep.subr.mxu0 0.0
        %579 = vmatpush2.msra.mxu0 0.0
        %580 = vmatprep.subr.mxu0 0.0
        %581 = vmatpush2.msra.mxu0 0.0
        %582 = vmatprep.subr.mxu0 0.0
        %583 = vmatpush2.msra.mxu0 0.0
        %584 = vmatprep.subr.mxu0 0.0
        %585 = vmatpush2.msra.mxu0 0.0
        %586 = vmatprep.mubr.f32.mxu0 0.0
        %587 = vmatmul.mubr.f32.gmra.mxu0 %v517
        %v588 = vpop.f32.mrf.mxu0
        %v589 = vadd.f32 0.0, %v588
        %v590 = vpop.f32.mrf.mxu0
        %591 = vmatprep.mubr.f32.mxu0 0.0
        %592 = vmatmul.mubr.f32.gmra.mxu0 %v520
        %v593 = vpop.f32.mrf.mxu0
        %v594 = vadd.f32 0.0, %v593
        %v595 = vpop.f32.mrf.mxu0
        %596 = vdwg.mxu0
        %v597 = vld [vmem:[#allocation2] sm:$0xff]
        %v598 = vld [vmem:[#allocation2 + $0x8] sm:$0xf]
        %v599 = vld [vmem:[#allocation3] sm:$0xff]
        %v600 = vld [vmem:[#allocation3 + $0x8] sm:$0xf]
        %vm601 = vcmask 130048
        %v603 = vsel %vm601, %v589, 0
        %v606 = vsel %vm601, %v594, 0
        %v609 = vsel %vm601, %v597, 0
        %v612 = vsel %vm601, %v598, 0
        %614 = vmatprep.subr.mxu0 0.0
        %615 = vmatpush1.xpose.msra.mxu0 0.0
        %616 = vmatprep.subr.mxu0 0.0
        %617 = vmatpush1.xpose.msra.mxu0 0.0
        %618 = vmatprep.subr.mxu0 0.0
        %619 = vmatpush1.xpose.msra.mxu0 0.0
        %620 = vmatprep.subr.mxu0 0.0
        %621 = vmatpush1.xpose.msra.mxu0 0.0
        %622 = vmatprep.subr.mxu0 0.0
        %623 = vmatpush1.xpose.msra.mxu0 0.0
        %624 = vmatprep.subr.mxu0 0.0
        %625 = vmatpush1.xpose.msra.mxu0 0.0
        %626 = vmatprep.subr.mxu0 0.0
        %627 = vmatpush1.xpose.msra.mxu0 0.0
        %628 = vmatprep.subr.mxu0 0.0
        %629 = vmatpush1.xpose.msra.mxu0 0.0
        %630 = vmatprep.subr.mxu0 0.0
        %631 = vmatpush1.xpose.msra.mxu0 0.0
        %632 = vmatprep.subr.mxu0 0.0
        %633 = vmatpush1.xpose.msra.mxu0 0.0
        %634 = vmatprep.subr.mxu0 0.0
        %635 = vmatpush1.xpose.msra.mxu0 0.0
        %636 = vmatprep.subr.mxu0 0.0
        %637 = vmatpush1.xpose.msra.mxu0 0.0
        %638 = vmatprep.subr.mxu0 0.0
        %639 = vmatpush1.xpose.msra.mxu0 0.0
        %640 = vmatprep.subr.mxu0 0.0
        %641 = vmatpush1.xpose.msra.mxu0 0.0
        %642 = vmatprep.subr.mxu0 0.0
        %643 = vmatpush1.xpose.msra.mxu0 %v612
        %644 = vmatprep.subr.mxu0 0.0
        %645 = vmatpush1.xpose.msra.mxu0 %v609
        %646 = vmatprep.subr.mxu0 0.0
        %647 = vmatpush2.xpose.msra.mxu0 0.0
        %648 = vmatprep.subr.mxu0 0.0
        %649 = vmatpush2.xpose.msra.mxu0 0.0
        %650 = vmatprep.subr.mxu0 0.0
        %651 = vmatpush2.xpose.msra.mxu0 0.0
        %652 = vmatprep.subr.mxu0 0.0
        %653 = vmatpush2.xpose.msra.mxu0 0.0
        %654 = vmatprep.subr.mxu0 0.0
        %655 = vmatpush2.xpose.msra.mxu0 0.0
        %656 = vmatprep.subr.mxu0 0.0
        %657 = vmatpush2.xpose.msra.mxu0 0.0
        %658 = vmatprep.subr.mxu0 0.0
        %659 = vmatpush2.xpose.msra.mxu0 0.0
        %660 = vmatprep.subr.mxu0 0.0
        %661 = vmatpush2.xpose.msra.mxu0 0.0
        %662 = vmatprep.subr.mxu0 0.0
        %663 = vmatpush2.xpose.msra.mxu0 0.0
        %664 = vmatprep.subr.mxu0 0.0
        %665 = vmatpush2.xpose.msra.mxu0 0.0
        %666 = vmatprep.subr.mxu0 0.0
        %667 = vmatpush2.xpose.msra.mxu0 0.0
        %668 = vmatprep.subr.mxu0 0.0
        %669 = vmatpush2.xpose.msra.mxu0 0.0
        %670 = vmatprep.subr.mxu0 0.0
        %671 = vmatpush2.xpose.msra.mxu0 0.0
        %672 = vmatprep.subr.mxu0 0.0
        %673 = vmatpush2.xpose.msra.mxu0 0.0
        %674 = vmatprep.subr.mxu0 0.0
        %675 = vmatpush2.xpose.msra.mxu0 0.0
        %676 = vmatprep.subr.mxu0 0.0
        %677 = vmatpush2.xpose.msra.mxu0 0.0
        %678 = vmatprep.mubr.f32.mxu0 0.0
        %679 = vmatmul.mubr.f32.gmra.mxu0 %v603
        %v680 = vpop.f32.mrf.mxu0
        %v681 = vadd.f32 0.0, %v680
        %v682 = vpop.f32.mrf.mxu0
        %683 = vmatprep.mubr.f32.mxu0 0.0
        %684 = vmatmul.mubr.f32.gmra.mxu0 %v606
        %v685 = vpop.f32.mrf.mxu0
        %v686 = vadd.f32 0.0, %v685
        %v687 = vpop.f32.mrf.mxu0
        %688 = vdwg.mxu0
        %vm689 = vcmask 97280
        %v690 = vsel %vm689, %v681, -inf
        %691 = vmax.xlane.f32.xlu0 %v690
        %v692 = vpop.xlane.xlu0 %691
        %v693 = vsel %vm689, %v686, -inf
        %694 = vmax.xlane.f32.xlu0 %v693
        %v695 = vpop.xlane.xlu0 %694
        %v696 = vsub.f32 %v681, %v692
        %v697 = vsub.f32 %v686, %v695
        %v698 = vmul.f32 %v696, 1.442695
        %v699 = vpow.pop %v698
        %v700 = vmul.f32 %v697, 1.442695
        %v701 = vpow.pop %v700
        %v702 = vsel %vm689, %v699, 0.0
        %703 = vadd.xlane.f32.xlu0 %v702
        %v704 = vpop.xlane.xlu0 %703
        %v705 = vsel %vm689, %v701, 0.0
        %706 = vadd.xlane.f32.xlu0 %v705
        %v707 = vpop.xlane.xlu0 %706
        %v708 = vrcp.pop %v704
        %v709 = vmul.f32 %v699, %v708
        %v710 = vrcp.pop %v707
        %v711 = vmul.f32 %v701, %v710
        %v713 = vsel %vm689, %v709, 0
        %v716 = vsel %vm689, %v711, 0
        %vm718 = vcmask 1043456
        %v720 = vsel %vm718, %v600, 0
        %722 = vmatprep.subr.mxu0 0.0
        %723 = vmatpush1.msra.mxu0 0.0
        %724 = vmatprep.subr.mxu0 0.0
        %725 = vmatpush1.msra.mxu0 0.0
        %726 = vmatprep.subr.mxu0 0.0
        %727 = vmatpush1.msra.mxu0 0.0
        %728 = vmatprep.subr.mxu0 0.0
        %729 = vmatpush1.msra.mxu0 0.0
        %730 = vmatprep.subr.mxu0 0.0
        %731 = vmatpush1.msra.mxu0 0.0
        %732 = vmatprep.subr.mxu0 0.0
        %733 = vmatpush1.msra.mxu0 0.0
        %734 = vmatprep.subr.mxu0 0.0
        %735 = vmatpush1.msra.mxu0 0.0
        %736 = vmatprep.subr.mxu0 0.0
        %737 = vmatpush1.msra.mxu0 0.0
        %738 = vmatprep.subr.mxu0 0.0
        %739 = vmatpush1.msra.mxu0 0.0
        %740 = vmatprep.subr.mxu0 0.0
        %741 = vmatpush1.msra.mxu0 0.0
        %742 = vmatprep.subr.mxu0 0.0
        %743 = vmatpush1.msra.mxu0 0.0
        %744 = vmatprep.subr.mxu0 0.0
        %745 = vmatpush1.msra.mxu0 0.0
        %746 = vmatprep.subr.mxu0 0.0
        %747 = vmatpush1.msra.mxu0 0.0
        %748 = vmatprep.subr.mxu0 0.0
        %749 = vmatpush1.msra.mxu0 0.0
        %750 = vmatprep.subr.mxu0 0.0
        %751 = vmatpush1.msra.mxu0 %v720
        %752 = vmatprep.subr.mxu0 0.0
        %753 = vmatpush1.msra.mxu0 %v599
        %754 = vmatprep.subr.mxu0 0.0
        %755 = vmatpush2.msra.mxu0 0.0
        %756 = vmatprep.subr.mxu0 0.0
        %757 = vmatpush2.msra.mxu0 0.0
        %758 = vmatprep.subr.mxu0 0.0
        %759 = vmatpush2.msra.mxu0 0.0
        %760 = vmatprep.subr.mxu0 0.0
        %761 = vmatpush2.msra.mxu0 0.0
        %762 = vmatprep.subr.mxu0 0.0
        %763 = vmatpush2.msra.mxu0 0.0
        %764 = vmatprep.subr.mxu0 0.0
        %765 = vmatpush2.msra.mxu0 0.0
        %766 = vmatprep.subr.mxu0 0.0
        %767 = vmatpush2.msra.mxu0 0.0
        %768 = vmatprep.subr.mxu0 0.0
        %769 = vmatpush2.msra.mxu0 0.0
        %770 = vmatprep.subr.mxu0 0.0
        %771 = vmatpush2.msra.mxu0 0.0
        %772 = vmatprep.subr.mxu0 0.0
        %773 = vmatpush2.msra.mxu0 0.0
        %774 = vmatprep.subr.mxu0 0.0
        %775 = vmatpush2.msra.mxu0 0.0
        %776 = vmatprep.subr.mxu0 0.0
        %777 = vmatpush2.msra.mxu0 0.0
        %778 = vmatprep.subr.mxu0 0.0
        %779 = vmatpush2.msra.mxu0 0.0
        %780 = vmatprep.subr.mxu0 0.0
        %781 = vmatpush2.msra.mxu0 0.0
        %782 = vmatprep.subr.mxu0 0.0
        %783 = vmatpush2.msra.mxu0 0.0
        %784 = vmatprep.subr.mxu0 0.0
        %785 = vmatpush2.msra.mxu0 0.0
        %786 = vmatprep.mubr.f32.mxu0 0.0
        %787 = vmatmul.mubr.f32.gmra.mxu0 %v713
        %v788 = vpop.f32.mrf.mxu0
        %v789 = vadd.f32 0.0, %v788
        %v790 = vpop.f32.mrf.mxu0
        %791 = vmatprep.mubr.f32.mxu0 0.0
        %792 = vmatmul.mubr.f32.gmra.mxu0 %v716
        %v793 = vpop.f32.mrf.mxu0
        %v794 = vadd.f32 0.0, %v793
        %v795 = vpop.f32.mrf.mxu0
        %796 = vdwg.mxu0
        %v797 = vld [vmem:[%s5] sm:$0xff]
        %v798 = vld [vmem:[%s5 + $0x8] sm:$0xff]
        %799 = vrot.lane.b32.xlu0 %v589, 112
        %v800 = vpop.permute.xlu0 %799
        %801 = vrot.lane.b32.xlu0 %v594, 112
        %v802 = vpop.permute.xlu0 %801
        %803 = vrot.lane.b32.xlu0 %v597, 112
        %v804 = vpop.permute.xlu0 %803
        %805 = vrot.lane.b32.xlu0 %v598, 112
        %v806 = vpop.permute.xlu0 %805
        %v807 = vsel %vm601, %v800, 0
        %v809 = vsel %vm601, %v802, 0
        %v811 = vsel %vm601, %v804, 0
        %v813 = vsel %vm601, %v806, 0
        %815 = vmatprep.subr.mxu0 0.0
        %816 = vmatpush1.xpose.msra.mxu0 0.0
        %817 = vmatprep.subr.mxu0 0.0
        %818 = vmatpush1.xpose.msra.mxu0 0.0
        %819 = vmatprep.subr.mxu0 0.0
        %820 = vmatpush1.xpose.msra.mxu0 0.0
        %821 = vmatprep.subr.mxu0 0.0
        %822 = vmatpush1.xpose.msra.mxu0 0.0
        %823 = vmatprep.subr.mxu0 0.0
        %824 = vmatpush1.xpose.msra.mxu0 0.0
        %825 = vmatprep.subr.mxu0 0.0
        %826 = vmatpush1.xpose.msra.mxu0 0.0
        %827 = vmatprep.subr.mxu0 0.0
        %828 = vmatpush1.xpose.msra.mxu0 0.0
        %829 = vmatprep.subr.mxu0 0.0
        %830 = vmatpush1.xpose.msra.mxu0 0.0
        %831 = vmatprep.subr.mxu0 0.0
        %832 = vmatpush1.xpose.msra.mxu0 0.0
        %833 = vmatprep.subr.mxu0 0.0
        %834 = vmatpush1.xpose.msra.mxu0 0.0
        %835 = vmatprep.subr.mxu0 0.0
        %836 = vmatpush1.xpose.msra.mxu0 0.0
        %837 = vmatprep.subr.mxu0 0.0
        %838 = vmatpush1.xpose.msra.mxu0 0.0
        %839 = vmatprep.subr.mxu0 0.0
        %840 = vmatpush1.xpose.msra.mxu0 0.0
        %841 = vmatprep.subr.mxu0 0.0
        %842 = vmatpush1.xpose.msra.mxu0 0.0
        %843 = vmatprep.subr.mxu0 0.0
        %844 = vmatpush1.xpose.msra.mxu0 %v813
        %845 = vmatprep.subr.mxu0 0.0
        %846 = vmatpush1.xpose.msra.mxu0 %v811
        %847 = vmatprep.subr.mxu0 0.0
        %848 = vmatpush2.xpose.msra.mxu0 0.0
        %849 = vmatprep.subr.mxu0 0.0
        %850 = vmatpush2.xpose.msra.mxu0 0.0
        %851 = vmatprep.subr.mxu0 0.0
        %852 = vmatpush2.xpose.msra.mxu0 0.0
        %853 = vmatprep.subr.mxu0 0.0
        %854 = vmatpush2.xpose.msra.mxu0 0.0
        %855 = vmatprep.subr.mxu0 0.0
        %856 = vmatpush2.xpose.msra.mxu0 0.0
        %857 = vmatprep.subr.mxu0 0.0
        %858 = vmatpush2.xpose.msra.mxu0 0.0
        %859 = vmatprep.subr.mxu0 0.0
        %860 = vmatpush2.xpose.msra.mxu0 0.0
        %861 = vmatprep.subr.mxu0 0.0
        %862 = vmatpush2.xpose.msra.mxu0 0.0
        %863 = vmatprep.subr.mxu0 0.0
        %864 = vmatpush2.xpose.msra.mxu0 0.0
        %865 = vmatprep.subr.mxu0 0.0
        %866 = vmatpush2.xpose.msra.mxu0 0.0
        %867 = vmatprep.subr.mxu0 0.0
        %868 = vmatpush2.xpose.msra.mxu0 0.0
        %869 = vmatprep.subr.mxu0 0.0
        %870 = vmatpush2.xpose.msra.mxu0 0.0
        %871 = vmatprep.subr.mxu0 0.0
        %872 = vmatpush2.xpose.msra.mxu0 0.0
        %873 = vmatprep.subr.mxu0 0.0
        %874 = vmatpush2.xpose.msra.mxu0 0.0
        %875 = vmatprep.subr.mxu0 0.0
        %876 = vmatpush2.xpose.msra.mxu0 0.0
        %877 = vmatprep.subr.mxu0 0.0
        %878 = vmatpush2.xpose.msra.mxu0 0.0
        %879 = vmatprep.mubr.f32.mxu0 0.0
        %880 = vmatmul.mubr.f32.gmra.mxu0 %v807
        %v881 = vpop.f32.mrf.mxu0
        %v882 = vadd.f32 0.0, %v881
        %v883 = vpop.f32.mrf.mxu0
        %884 = vmatprep.mubr.f32.mxu0 0.0
        %885 = vmatmul.mubr.f32.gmra.mxu0 %v809
        %v886 = vpop.f32.mrf.mxu0
        %v887 = vadd.f32 0.0, %v886
        %v888 = vpop.f32.mrf.mxu0
        %889 = vdwg.mxu0
        %v890 = vsel %vm689, %v882, -inf
        %891 = vmax.xlane.f32.xlu0 %v890
        %v892 = vpop.xlane.xlu0 %891
        %v893 = vsel %vm689, %v887, -inf
        %894 = vmax.xlane.f32.xlu0 %v893
        %v895 = vpop.xlane.xlu0 %894
        %v896 = vsub.f32 %v882, %v892
        %v897 = vsub.f32 %v887, %v895
        %v898 = vmul.f32 %v896, 1.442695
        %v899 = vpow.pop %v898
        %v900 = vmul.f32 %v897, 1.442695
        %v901 = vpow.pop %v900
        %v902 = vsel %vm689, %v899, 0.0
        %903 = vadd.xlane.f32.xlu0 %v902
        %v904 = vpop.xlane.xlu0 %903
        %v905 = vsel %vm689, %v901, 0.0
        %906 = vadd.xlane.f32.xlu0 %v905
        %v907 = vpop.xlane.xlu0 %906
        %v908 = vrcp.pop %v904
        %v909 = vmul.f32 %v899, %v908
        %v910 = vrcp.pop %v907
        %v911 = vmul.f32 %v901, %v910
        %913 = vrot.lane.b32.xlu0 %v599, 112
        %v914 = vpop.permute.xlu0 %913
        %915 = vrot.lane.b32.xlu0 %v600, 112
        %v916 = vpop.permute.xlu0 %915
        %v919 = vsel %vm689, %v909, 0
        %v922 = vsel %vm689, %v911, 0
        %v924 = vsel %vm718, %v916, 0
        %926 = vmatprep.subr.mxu0 0.0
        %927 = vmatpush1.msra.mxu0 0.0
        %928 = vmatprep.subr.mxu0 0.0
        %929 = vmatpush1.msra.mxu0 0.0
        %930 = vmatprep.subr.mxu0 0.0
        %931 = vmatpush1.msra.mxu0 0.0
        %932 = vmatprep.subr.mxu0 0.0
        %933 = vmatpush1.msra.mxu0 0.0
        %934 = vmatprep.subr.mxu0 0.0
        %935 = vmatpush1.msra.mxu0 0.0
        %936 = vmatprep.subr.mxu0 0.0
        %937 = vmatpush1.msra.mxu0 0.0
        %938 = vmatprep.subr.mxu0 0.0
        %939 = vmatpush1.msra.mxu0 0.0
        %940 = vmatprep.subr.mxu0 0.0
        %941 = vmatpush1.msra.mxu0 0.0
        %942 = vmatprep.subr.mxu0 0.0
        %943 = vmatpush1.msra.mxu0 0.0
        %944 = vmatprep.subr.mxu0 0.0
        %945 = vmatpush1.msra.mxu0 0.0
        %946 = vmatprep.subr.mxu0 0.0
        %947 = vmatpush1.msra.mxu0 0.0
        %948 = vmatprep.subr.mxu0 0.0
        %949 = vmatpush1.msra.mxu0 0.0
        %950 = vmatprep.subr.mxu0 0.0
        %951 = vmatpush1.msra.mxu0 0.0
        %952 = vmatprep.subr.mxu0 0.0
        %953 = vmatpush1.msra.mxu0 0.0
        %954 = vmatprep.subr.mxu0 0.0
        %955 = vmatpush1.msra.mxu0 %v924
        %956 = vmatprep.subr.mxu0 0.0
        %957 = vmatpush1.msra.mxu0 %v914
        %958 = vmatprep.subr.mxu0 0.0
        %959 = vmatpush2.msra.mxu0 0.0
        %960 = vmatprep.subr.mxu0 0.0
        %961 = vmatpush2.msra.mxu0 0.0
        %962 = vmatprep.subr.mxu0 0.0
        %963 = vmatpush2.msra.mxu0 0.0
        %964 = vmatprep.subr.mxu0 0.0
        %965 = vmatpush2.msra.mxu0 0.0
        %966 = vmatprep.subr.mxu0 0.0
        %967 = vmatpush2.msra.mxu0 0.0
        %968 = vmatprep.subr.mxu0 0.0
        %969 = vmatpush2.msra.mxu0 0.0
        %970 = vmatprep.subr.mxu0 0.0
        %971 = vmatpush2.msra.mxu0 0.0
        %972 = vmatprep.subr.mxu0 0.0
        %973 = vmatpush2.msra.mxu0 0.0
        %974 = vmatprep.subr.mxu0 0.0
        %975 = vmatpush2.msra.mxu0 0.0
        %976 = vmatprep.subr.mxu0 0.0
        %977 = vmatpush2.msra.mxu0 0.0
        %978 = vmatprep.subr.mxu0 0.0
        %979 = vmatpush2.msra.mxu0 0.0
        %980 = vmatprep.subr.mxu0 0.0
        %981 = vmatpush2.msra.mxu0 0.0
        %982 = vmatprep.subr.mxu0 0.0
        %983 = vmatpush2.msra.mxu0 0.0
        %984 = vmatprep.subr.mxu0 0.0
        %985 = vmatpush2.msra.mxu0 0.0
        %986 = vmatprep.subr.mxu0 0.0
        %987 = vmatpush2.msra.mxu0 0.0
        %988 = vmatprep.subr.mxu0 0.0
        %989 = vmatpush2.msra.mxu0 0.0
        %990 = vmatprep.mubr.f32.mxu0 0.0
        %991 = vmatmul.mubr.f32.gmra.mxu0 %v919
        %v992 = vpop.f32.mrf.mxu0
        %v993 = vadd.f32 0.0, %v992
        %v994 = vpop.f32.mrf.mxu0
        %995 = vmatprep.mubr.f32.mxu0 0.0
        %996 = vmatmul.mubr.f32.gmra.mxu0 %v922
        %v997 = vpop.f32.mrf.mxu0
        %v998 = vadd.f32 0.0, %v997
        %v999 = vpop.f32.mrf.mxu0
        %1000 = vdwg.mxu0
        %v1001 = vld [vmem:[%s5 + $0x10] sm:$0xff]
        %v1002 = vld [vmem:[%s5 + $0x18] sm:$0xff]
        %v1004 = vsel %vm601, %v993, 0
        %v1007 = vsel %vm601, %v998, 0
        %1009 = vmatprep.subr.mxu0 0.0
        %1010 = vmatpush1.msra.mxu0 0.0
        %1011 = vmatprep.subr.mxu0 0.0
        %1012 = vmatpush1.msra.mxu0 0.0
        %1013 = vmatprep.subr.mxu0 0.0
        %1014 = vmatpush1.msra.mxu0 0.0
        %1015 = vmatprep.subr.mxu0 0.0
        %1016 = vmatpush1.msra.mxu0 0.0
        %1017 = vmatprep.subr.mxu0 0.0
        %1018 = vmatpush1.msra.mxu0 0.0
        %1019 = vmatprep.subr.mxu0 0.0
        %1020 = vmatpush1.msra.mxu0 0.0
        %1021 = vmatprep.subr.mxu0 0.0
        %1022 = vmatpush1.msra.mxu0 0.0
        %1023 = vmatprep.subr.mxu0 0.0
        %1024 = vmatpush1.msra.mxu0 0.0
        %1025 = vmatprep.subr.mxu0 0.0
        %1026 = vmatpush1.msra.mxu0 0.0
        %1027 = vmatprep.subr.mxu0 0.0
        %1028 = vmatpush1.msra.mxu0 0.0
        %1029 = vmatprep.subr.mxu0 0.0
        %1030 = vmatpush1.msra.mxu0 0.0
        %1031 = vmatprep.subr.mxu0 0.0
        %1032 = vmatpush1.msra.mxu0 0.0
        %1033 = vmatprep.subr.mxu0 0.0
        %1034 = vmatpush1.msra.mxu0 0.0
        %1035 = vmatprep.subr.mxu0 0.0
        %1036 = vmatpush1.msra.mxu0 0.0
        %1037 = vmatprep.subr.mxu0 0.0
        %1038 = vmatpush1.msra.mxu0 %v1002
        %1039 = vmatprep.subr.mxu0 0.0
        %1040 = vmatpush1.msra.mxu0 %v1001
        %1041 = vmatprep.subr.mxu0 0.0
        %1042 = vmatpush2.msra.mxu0 0.0
        %1043 = vmatprep.subr.mxu0 0.0
        %1044 = vmatpush2.msra.mxu0 0.0
        %1045 = vmatprep.subr.mxu0 0.0
        %1046 = vmatpush2.msra.mxu0 0.0
        %1047 = vmatprep.subr.mxu0 0.0
        %1048 = vmatpush2.msra.mxu0 0.0
        %1049 = vmatprep.subr.mxu0 0.0
        %1050 = vmatpush2.msra.mxu0 0.0
        %1051 = vmatprep.subr.mxu0 0.0
        %1052 = vmatpush2.msra.mxu0 0.0
        %1053 = vmatprep.subr.mxu0 0.0
        %1054 = vmatpush2.msra.mxu0 0.0
        %1055 = vmatprep.subr.mxu0 0.0
        %1056 = vmatpush2.msra.mxu0 0.0
        %1057 = vmatprep.subr.mxu0 0.0
        %1058 = vmatpush2.msra.mxu0 0.0
        %1059 = vmatprep.subr.mxu0 0.0
        %1060 = vmatpush2.msra.mxu0 0.0
        %1061 = vmatprep.subr.mxu0 0.0
        %1062 = vmatpush2.msra.mxu0 0.0
        %1063 = vmatprep.subr.mxu0 0.0
        %1064 = vmatpush2.msra.mxu0 0.0
        %1065 = vmatprep.subr.mxu0 0.0
        %1066 = vmatpush2.msra.mxu0 0.0
        %1067 = vmatprep.subr.mxu0 0.0
        %1068 = vmatpush2.msra.mxu0 0.0
        %1069 = vmatprep.subr.mxu0 0.0
        %1070 = vmatpush2.msra.mxu0 0.0
        %1071 = vmatprep.subr.mxu0 0.0
        %1072 = vmatpush2.msra.mxu0 0.0
        %1073 = vmatprep.mubr.f32.mxu0 0.0
        %1074 = vmatmul.mubr.f32.gmra.mxu0 %v1004
        %v1075 = vpop.f32.mrf.mxu0
        %v1076 = vadd.f32 0.0, %v1075
        %v1077 = vpop.f32.mrf.mxu0
        %1078 = vmatprep.mubr.f32.mxu0 0.0
        %1079 = vmatmul.mubr.f32.gmra.mxu0 %v1007
        %v1080 = vpop.f32.mrf.mxu0
        %v1081 = vadd.f32 0.0, %v1080
        %v1082 = vpop.f32.mrf.mxu0
        %1083 = vdwg.mxu0
        %v1085 = vsel %vm601, %v789, 0
        %v1088 = vsel %vm601, %v794, 0
        %1090 = vmatprep.subr.mxu0 0.0
        %1091 = vmatpush1.msra.mxu0 0.0
        %1092 = vmatprep.subr.mxu0 0.0
        %1093 = vmatpush1.msra.mxu0 0.0
        %1094 = vmatprep.subr.mxu0 0.0
        %1095 = vmatpush1.msra.mxu0 0.0
        %1096 = vmatprep.subr.mxu0 0.0
        %1097 = vmatpush1.msra.mxu0 0.0
        %1098 = vmatprep.subr.mxu0 0.0
        %1099 = vmatpush1.msra.mxu0 0.0
        %1100 = vmatprep.subr.mxu0 0.0
        %1101 = vmatpush1.msra.mxu0 0.0
        %1102 = vmatprep.subr.mxu0 0.0
        %1103 = vmatpush1.msra.mxu0 0.0
        %1104 = vmatprep.subr.mxu0 0.0
        %1105 = vmatpush1.msra.mxu0 0.0
        %1106 = vmatprep.subr.mxu0 0.0
        %1107 = vmatpush1.msra.mxu0 0.0
        %1108 = vmatprep.subr.mxu0 0.0
        %1109 = vmatpush1.msra.mxu0 0.0
        %1110 = vmatprep.subr.mxu0 0.0
        %1111 = vmatpush1.msra.mxu0 0.0
        %1112 = vmatprep.subr.mxu0 0.0
        %1113 = vmatpush1.msra.mxu0 0.0
        %1114 = vmatprep.subr.mxu0 0.0
        %1115 = vmatpush1.msra.mxu0 0.0
        %1116 = vmatprep.subr.mxu0 0.0
        %1117 = vmatpush1.msra.mxu0 0.0
        %1118 = vmatprep.subr.mxu0 0.0
        %1119 = vmatpush1.msra.mxu0 %v798
        %1120 = vmatprep.subr.mxu0 0.0
        %1121 = vmatpush1.msra.mxu0 %v797
        %1122 = vmatprep.subr.mxu0 0.0
        %1123 = vmatpush2.msra.mxu0 0.0
        %1124 = vmatprep.subr.mxu0 0.0
        %1125 = vmatpush2.msra.mxu0 0.0
        %1126 = vmatprep.subr.mxu0 0.0
        %1127 = vmatpush2.msra.mxu0 0.0
        %1128 = vmatprep.subr.mxu0 0.0
        %1129 = vmatpush2.msra.mxu0 0.0
        %1130 = vmatprep.subr.mxu0 0.0
        %1131 = vmatpush2.msra.mxu0 0.0
        %1132 = vmatprep.subr.mxu0 0.0
        %1133 = vmatpush2.msra.mxu0 0.0
        %1134 = vmatprep.subr.mxu0 0.0
        %1135 = vmatpush2.msra.mxu0 0.0
        %1136 = vmatprep.subr.mxu0 0.0
        %1137 = vmatpush2.msra.mxu0 0.0
        %1138 = vmatprep.subr.mxu0 0.0
        %1139 = vmatpush2.msra.mxu0 0.0
        %1140 = vmatprep.subr.mxu0 0.0
        %1141 = vmatpush2.msra.mxu0 0.0
        %1142 = vmatprep.subr.mxu0 0.0
        %1143 = vmatpush2.msra.mxu0 0.0
        %1144 = vmatprep.subr.mxu0 0.0
        %1145 = vmatpush2.msra.mxu0 0.0
        %1146 = vmatprep.subr.mxu0 0.0
        %1147 = vmatpush2.msra.mxu0 0.0
        %1148 = vmatprep.subr.mxu0 0.0
        %1149 = vmatpush2.msra.mxu0 0.0
        %1150 = vmatprep.subr.mxu0 0.0
        %1151 = vmatpush2.msra.mxu0 0.0
        %1152 = vmatprep.subr.mxu0 0.0
        %1153 = vmatpush2.msra.mxu0 0.0
        %1154 = vmatprep.mubr.f32.mxu0 0.0
        %1155 = vmatmul.mubr.f32.gmra.mxu0 %v1085
        %v1156 = vpop.f32.mrf.mxu0
        %v1157 = vadd.f32 %v1076, %v1156
        %v1158 = vpop.f32.mrf.mxu0
        %1159 = vmatprep.mubr.f32.mxu0 0.0
        %1160 = vmatmul.mubr.f32.gmra.mxu0 %v1088
        %v1161 = vpop.f32.mrf.mxu0
        %v1162 = vadd.f32 %v1081, %v1161
        %v1163 = vpop.f32.mrf.mxu0
        %1164 = vdwg.mxu0
        %v1165 = vld [vmem:[%s6] sm:$0x1]
        %v1167 = vlaneseq
        %v1168 = vshrl.u32 %v1167, 7
        %v1169 = vsub.s32 0, %v1168
        %v1170 = vrot.slane %v1165, %v1169
        %v1172 = vadd.f32 %v1157, %v1170
        %v1173 = vadd.f32 %v1162, %v1170
        %1174 = vst.msk [vmem:[%s311] sm:$0xff] %vm515, %v1172
        %1175 = vst.msk [vmem:[%s311 + $0x8] sm:$0xff] %vm515, %v1173
        %s1176 = sand.u32 %s202, 1
        %s1177 = scalar_lea.sflag [#allocation5], %s1176
        %s1178 = sand.u32 %s202, 1
        %s1179 = smul.addr %s1178, 16
        %s1180 = scalar_lea.vmem [#allocation4], %s1179
        // Predicated region
        $region53: #{tpu_custom_call.1} parent=47 // pred_check
          %p1181 = pneg %p212
        $region54: #{tpu_custom_call.1} parent=47 // pred_check_branch
          %1183 = sbr.rel (%p1181) target = $region56
        $region55: #{tpu_custom_call.1} parent=47 // pred_region
          %s1184 = smul.u32 2, %s26
          %s1186 = ssub.s32 256, 256
          %1187 = vsyncadd %s1177, %s1186
          %s1188 = smul.addr %s25, 2
          %s1189 = sadd.s32 %s1184, %s1188
          %s1190 = smul.addr %s1189, 128
          %s1191 = scalar_lea.hbm %s7, %s1190
          %s1192 = sshll.u32 %s1180, 4
          %s1193 = int_to_ptr.vmem [resolvable:$true] %s1192
          %1198 = dma.vmem_to_hbm [thread:$0]  %s1193, 256, %s1191, %s1177, 128, 128, 8
        $region56: #{tpu_custom_call.1} parent=47 // pred_fallthru
          _
      $region48: #{tpu_custom_call.1} parent=5 // pred_fallthru
        _
      %p1199 = scmp.le.s32.totalorder 2, %s16
      // Predicated region
      $region57: #{tpu_custom_call.1} parent=5 // pred_check
        %p1200 = pneg %p1199
      $region58: #{tpu_custom_call.1} parent=5 // pred_check_branch
        %1202 = sbr.rel (%p1200) target = $region60
      $region59: #{tpu_custom_call.1} parent=5 // pred_region
        %s1203 = ssub.s32 %s16, 2
        // Predicated region
        $region61: #{tpu_custom_call.1} parent=59 // pred_check
          %p1204 = pneg %p218
        $region62: #{tpu_custom_call.1} parent=59 // pred_check_branch
          %1206 = sbr.rel (%p1204) target = $region64
        $region63: #{tpu_custom_call.1} parent=59 // pred_region
          %s1207 = sand.u32 %s203, 1
          %s1208 = scalar_lea.sflag [#allocation5], %s1207
          %s1209 = sand.u32 %s203, 1
          %s1210 = smul.addr %s1209, 16
          %s1211 = scalar_lea.vmem [#allocation4], %s1210
          %1212 = dma.done %s1208, 256
        $region64: #{tpu_custom_call.1} parent=59 // pred_fallthru
          _
      $region60: #{tpu_custom_call.1} parent=5 // pred_fallthru
        _
    $region6: #{tpu_custom_call.1} parent=1 // loop_footer
      %s20 = sadd.s32 1, %s16
    $region7: #{tpu_custom_call.1} parent=1 // loop_footer_branch
      %15 = sbr.rel target = $region3
    $region8: #{tpu_custom_call.1} parent=1 // loop_exit
      _
    %1213 = vsyncpa [#allocation5], 1
    %s1214 = scalar_lea.sflag [#allocation5], 1
    %1215 = vsyncpa %s1214, 1

// kernel: tpu_custom_call.1
$region0: #{tpu_custom_call.1}
  #allocation0 [shape = 'u32[]', space=smem, size = 0x4, offset = 0x4, fixed_abs, tag = 'smem constant byte address 0x4 - core index']
  #allocation1 [shape = 'u32[144,128]{1,0:T(1,128)}', space=vmem, size = 0x12000, scoped, tag = 'internal scratch']
  #allocation2 [shape = 'f32[12,32]{1,0:T(8,128)}', space=vmem, size = 0x2000, scoped, tag = 'scratch operand']
  #allocation3 [shape = 'f32[12,32]{1,0:T(8,128)}', space=vmem, size = 0x2000, scoped, tag = 'scratch operand']
  %s0 = inlined_call_operand.vmem [shape: f32[2,16,32], index: 0, kind: input, shape index: {}]
  %s1 = inlined_call_operand.vmem [shape: f32[2,12,48], index: 1, kind: input, shape index: {}]
  %s2 = inlined_call_operand.vmem [shape: f32[32,32], index: 2, kind: input, shape index: {}]
  %s3 = inlined_call_operand.vmem [shape: f32[48,32], index: 3, kind: input, shape index: {}]
  %s4 = inlined_call_operand.vmem [shape: f32[48,32], index: 4, kind: input, shape index: {}]
  %s5 = inlined_call_operand.vmem [shape: f32[32,32], index: 5, kind: input, shape index: {}]
  %s6 = inlined_call_operand.vmem [shape: f32[1,32], index: 6, kind: input, shape index: {}]
  %s7 = inlined_call_operand.hbm [shape: f32[2,16,32], index: 7, kind: output, shape index: {}]
  %s8 = sld [smem:[#allocation0]]
  $region65: #{tpu_custom_call.1} parent=0
    _
  %s10 = ssub.s32 1, %s8
  %s11 = scalar_select 0, %s10, %s8
  $region1: #{tpu_custom_call.1} parent=0
    #allocation4 [shape = 'u8[16384]{0}', space=vmem, size = 0x4000, scoped, tag = 'output window, operand 0']
    #allocation5 [shape = 's32[2]{0}', space=sflag, size = 0x8, scoped, tag = 'scoped memory for tpu_custom_call.1']
    %12 = vsyncpa [#allocation5], 0
    %s13 = scalar_lea.sflag [#allocation5], 1
    %14 = vsyncpa %s13, 0
    loop: start=0, step=1, limit=4
    $region2: #{tpu_custom_call.1} parent=1 // loop_pre_header
      _
    $region3: #{tpu_custom_call.1} parent=1 // loop_header
      %s16 = sphi 0, %s20
      %p17 = scmp.ge.s32.totalorder %s16, 4
      %s23 = sphi 0, %s35
      %s24 = sphi 0, %s31
      %s25 = sphi 0, %s23
      %s26 = sphi 0, %s24
      %s27 = sphi 0, %s25
      %s28 = sphi 0, %s26
      %s40 = sphi 0, %s42
      %s43 = sphi 0, %s40
      %s44 = sphi 0, %s43
      %s60 = sphi 0, %s44
      %s66 = sphi 0, %s68
      %s69 = sphi 0, %s66
      %s70 = sphi 0, %s69
      %s86 = sphi 0, %s70
      %s90 = sphi 0, %s90
      %s92 = sphi 0, %s90
      %s93 = sphi 0, %s92
      %s107 = sphi 0, %s93
      %s111 = sphi 0, %s111
      %s113 = sphi 0, %s111
      %s114 = sphi 0, %s113
      %s128 = sphi 0, %s114
      %s132 = sphi 0, %s132
      %s134 = sphi 0, %s132
      %s135 = sphi 0, %s134
      %s149 = sphi 0, %s135
      %s153 = sphi 0, %s153
      %s155 = sphi 0, %s153
      %s156 = sphi 0, %s155
      %s170 = sphi 0, %s156
      %s174 = sphi 0, %s174
      %s176 = sphi 0, %s174
      %s177 = sphi 0, %s176
      %s191 = sphi 0, %s177
      %s199 = sphi 0, %s201
      %s202 = sphi 0, %s199
      %s203 = sphi 0, %s202
      %s219 = sphi 0, %s203
    $region4: #{tpu_custom_call.1} parent=1 // loop_header_branch
      %19 = sbr.rel (%p17) target = $region8
    $region5: #{tpu_custom_call.1} parent=1 // loop_body
      %s21 = ssub.s32 %s16, 1
      %s22 = ssub.s32 %s16, 2
      %s29 = sadd.s32 1, %s24
      %p30 = scmp.ge.s32.totalorder %s29, 1
      %s31 = scalar_select %p30, 0, %s29
      %s32 = sadd.s32 1, %s23
      %s33 = scalar_select %p30, %s32, %s23
      %p34 = scmp.ge.s32.totalorder %s33, 2
      %s35 = scalar_select %p34, 0, %s33
      %s36 = ssub.s32 %s23, %s35
      %s37 = ssub.s32 %s24, %s31
      %s38 = sor.u32 %s36, %s37
      %p39 = scmp.eq.s32.totalorder %s38, 0
      %s41 = sadd.s32 %s40, 1
      %s42 = scalar_select %p39, %s40, %s41
      %p45 = pneg %p39
      %p46 = scmp.eq.s32.totalorder %s16, 1
      %p47 = por %p45, %p46
      %p48 = scmp.ne.s32.totalorder %s40, %s43
      %p49 = scmp.eq.s32.totalorder %s16, 0
      %p50 = por %p48, %p49
      %p51 = scmp.ne.s32.totalorder %s40, %s43
      %p52 = scmp.eq.s32.totalorder %s21, 1
      %p53 = por %p51, %p52
      %p54 = scmp.ne.s32.totalorder %s43, %s44
      %p55 = scmp.eq.s32.totalorder %s21, 0
      %p56 = por %p54, %p55
      %p57 = scmp.ne.s32.totalorder %s43, %s44
      %p58 = scmp.eq.s32.totalorder %s22, 1
      %p59 = por %p57, %p58
      %p61 = scmp.ne.s32.totalorder %s44, %s60
      %p62 = scmp.eq.s32.totalorder %s22, 0
      %p63 = por %p61, %p62
      %s64 = ssub.s32 %s23, %s35
      %p65 = scmp.eq.s32.totalorder %s64, 0
      %s67 = sadd.s32 %s66, 1
      %s68 = scalar_select %p65, %s66, %s67
      %p71 = pneg %p65
      %p72 = scmp.eq.s32.totalorder %s16, 1
      %p73 = por %p71, %p72
      %p74 = scmp.ne.s32.totalorder %s66, %s69
      %p75 = scmp.eq.s32.totalorder %s16, 0
      %p76 = por %p74, %p75
      %p77 = scmp.ne.s32.totalorder %s66, %s69
      %p78 = scmp.eq.s32.totalorder %s21, 1
      %p79 = por %p77, %p78
      %p80 = scmp.ne.s32.totalorder %s69, %s70
      %p81 = scmp.eq.s32.totalorder %s21, 0
      %p82 = por %p80, %p81
      %p83 = scmp.ne.s32.totalorder %s69, %s70
      %p84 = scmp.eq.s32.totalorder %s22, 1
      %p85 = por %p83, %p84
      %p87 = scmp.ne.s32.totalorder %s70, %s86
      %p88 = scmp.eq.s32.totalorder %s22, 0
      %p89 = por %p87, %p88
      %s91 = sadd.s32 %s90, 1
      %p94 = scmp.eq.s32.totalorder %s16, 1
      %p95 = scmp.ne.s32.totalorder %s90, %s92
      %p96 = scmp.eq.s32.totalorder %s16, 0
      %p97 = por %p95, %p96
      %p98 = scmp.ne.s32.totalorder %s90, %s92
      %p99 = scmp.eq.s32.totalorder %s21, 1
      %p100 = por %p98, %p99
      %p101 = scmp.ne.s32.totalorder %s92, %s93
      %p102 = scmp.eq.s32.totalorder %s21, 0
      %p103 = por %p101, %p102
      %p104 = scmp.ne.s32.totalorder %s92, %s93
      %p105 = scmp.eq.s32.totalorder %s22, 1
      %p106 = por %p104, %p105
      %p108 = scmp.ne.s32.totalorder %s93, %s107
      %p109 = scmp.eq.s32.totalorder %s22, 0
      %p110 = por %p108, %p109
      %s112 = sadd.s32 %s111, 1
      %p115 = scmp.eq.s32.totalorder %s16, 1
      %p116 = scmp.ne.s32.totalorder %s111, %s113
      %p117 = scmp.eq.s32.totalorder %s16, 0
      %p118 = por %p116, %p117
      %p119 = scmp.ne.s32.totalorder %s111, %s113
      %p120 = scmp.eq.s32.totalorder %s21, 1
      %p121 = por %p119, %p120
      %p122 = scmp.ne.s32.totalorder %s113, %s114
      %p123 = scmp.eq.s32.totalorder %s21, 0
      %p124 = por %p122, %p123
      %p125 = scmp.ne.s32.totalorder %s113, %s114
      %p126 = scmp.eq.s32.totalorder %s22, 1
      %p127 = por %p125, %p126
      %p129 = scmp.ne.s32.totalorder %s114, %s128
      %p130 = scmp.eq.s32.totalorder %s22, 0
      %p131 = por %p129, %p130
      %s133 = sadd.s32 %s132, 1
      %p136 = scmp.eq.s32.totalorder %s16, 1
      %p137 = scmp.ne.s32.totalorder %s132, %s134
      %p138 = scmp.eq.s32.totalorder %s16, 0
      %p139 = por %p137, %p138
      %p140 = scmp.ne.s32.totalorder %s132, %s134
      %p141 = scmp.eq.s32.totalorder %s21, 1
      %p142 = por %p140, %p141
      %p143 = scmp.ne.s32.totalorder %s134, %s135
      %p144 = scmp.eq.s32.totalorder %s21, 0
      %p145 = por %p143, %p144
      %p146 = scmp.ne.s32.totalorder %s134, %s135
      %p147 = scmp.eq.s32.totalorder %s22, 1
      %p148 = por %p146, %p147
      %p150 = scmp.ne.s32.totalorder %s135, %s149
      %p151 = scmp.eq.s32.totalorder %s22, 0
      %p152 = por %p150, %p151
      %s154 = sadd.s32 %s153, 1
      %p157 = scmp.eq.s32.totalorder %s16, 1
      %p158 = scmp.ne.s32.totalorder %s153, %s155
      %p159 = scmp.eq.s32.totalorder %s16, 0
      %p160 = por %p158, %p159
      %p161 = scmp.ne.s32.totalorder %s153, %s155
      %p162 = scmp.eq.s32.totalorder %s21, 1
      %p163 = por %p161, %p162
      %p164 = scmp.ne.s32.totalorder %s155, %s156
      %p165 = scmp.eq.s32.totalorder %s21, 0
      %p166 = por %p164, %p165
      %p167 = scmp.ne.s32.totalorder %s155, %s156
      %p168 = scmp.eq.s32.totalorder %s22, 1
      %p169 = por %p167, %p168
      %p171 = scmp.ne.s32.totalorder %s156, %s170
      %p172 = scmp.eq.s32.totalorder %s22, 0
      %p173 = por %p171, %p172
      %s175 = sadd.s32 %s174, 1
      %p178 = scmp.eq.s32.totalorder %s16, 1
      %p179 = scmp.ne.s32.totalorder %s174, %s176
      %p180 = scmp.eq.s32.totalorder %s16, 0
      %p181 = por %p179, %p180
      %p182 = scmp.ne.s32.totalorder %s174, %s176
      %p183 = scmp.eq.s32.totalorder %s21, 1
      %p184 = por %p182, %p183
      %p185 = scmp.ne.s32.totalorder %s176, %s177
      %p186 = scmp.eq.s32.totalorder %s21, 0
      %p187 = por %p185, %p186
      %p188 = scmp.ne.s32.totalorder %s176, %s177
      %p189 = scmp.eq.s32.totalorder %s22, 1
      %p190 = por %p188, %p189
      %p192 = scmp.ne.s32.totalorder %s177, %s191
      %p193 = scmp.eq.s32.totalorder %s22, 0
      %p194 = por %p192, %p193
      %s195 = ssub.s32 %s23, %s35
      %s196 = ssub.s32 %s24, %s31
      %s197 = sor.u32 %s195, %s196
      %p198 = scmp.eq.s32.totalorder %s197, 0
      %s200 = sadd.s32 %s199, 1
      %s201 = scalar_select %p198, %s199, %s200
      %p204 = pneg %p198
      %p205 = scmp.eq.s32.totalorder %s16, 1
      %p206 = por %p204, %p205
      %p207 = scmp.ne.s32.totalorder %s199, %s202
      %p208 = scmp.eq.s32.totalorder %s16, 0
      %p209 = por %p207, %p208
      %p210 = scmp.ne.s32.totalorder %s199, %s202
      %p211 = scmp.eq.s32.totalorder %s21, 1
      %p212 = por %p210, %p211
      %p213 = scmp.ne.s32.totalorder %s202, %s203
      %p214 = scmp.eq.s32.totalorder %s21, 0
      %p215 = por %p213, %p214
      %p216 = scmp.ne.s32.totalorder %s202, %s203
      %p217 = scmp.eq.s32.totalorder %s22, 1
      %p218 = por %p216, %p217
      %p220 = scmp.ne.s32.totalorder %s203, %s219
      %p221 = scmp.eq.s32.totalorder %s22, 0
      %p222 = por %p220, %p221
      %p223 = scmp.le.s32.totalorder 1, %s16
      %p224 = scmp.lt.s32.totalorder %s16, 3
      %p225 = pnand %p223, %p224
      %p226 = pneg %p225
      // Predicated region
      $region9: #{tpu_custom_call.1} parent=5 // pred_check
        _
      $region10: #{tpu_custom_call.1} parent=5 // pred_check_branch
        %228 = sbr.rel (%p225) target = $region12
      $region11: #{tpu_custom_call.1} parent=5 // pred_region
        %s229 = ssub.s32 %s16, 1
        // Predicated region
        $region13: #{tpu_custom_call.1} parent=11 // pred_check
          %p230 = pneg %p103
        $region14: #{tpu_custom_call.1} parent=11 // pred_check_branch
          %232 = sbr.rel (%p230) target = $region16
        $region15: #{tpu_custom_call.1} parent=11 // pred_region
          _
        $region16: #{tpu_custom_call.1} parent=11 // pred_fallthru
          _
        // Predicated region
        $region17: #{tpu_custom_call.1} parent=11 // pred_check
          %p233 = pneg %p124
        $region18: #{tpu_custom_call.1} parent=11 // pred_check_branch
          %235 = sbr.rel (%p233) target = $region20
        $region19: #{tpu_custom_call.1} parent=11 // pred_region
          _
        $region20: #{tpu_custom_call.1} parent=11 // pred_fallthru
          _
        // Predicated region
        $region21: #{tpu_custom_call.1} parent=11 // pred_check
          %p236 = pneg %p145
        $region22: #{tpu_custom_call.1} parent=11 // pred_check_branch
          %238 = sbr.rel (%p236) target = $region24
        $region23: #{tpu_custom_call.1} parent=11 // pred_region
          _
        $region24: #{tpu_custom_call.1} parent=11 // pred_fallthru
          _
        // Predicated region
        $region25: #{tpu_custom_call.1} parent=11 // pred_check
          %p239 = pneg %p166
        $region26: #{tpu_custom_call.1} parent=11 // pred_check_branch
          %241 = sbr.rel (%p239) target = $region28
        $region27: #{tpu_custom_call.1} parent=11 // pred_region
          _
        $region28: #{tpu_custom_call.1} parent=11 // pred_fallthru
          _
        // Predicated region
        $region29: #{tpu_custom_call.1} parent=11 // pred_check
          %p242 = pneg %p187
        $region30: #{tpu_custom_call.1} parent=11 // pred_check_branch
          %244 = sbr.rel (%p242) target = $region32
        $region31: #{tpu_custom_call.1} parent=11 // pred_region
          _
        $region32: #{tpu_custom_call.1} parent=11 // pred_fallthru
          _
      $region12: #{tpu_custom_call.1} parent=5 // pred_fallthru
        _
      %p245 = scmp.lt.s32.totalorder %s16, 2
      // Predicated region
      $region33: #{tpu_custom_call.1} parent=5 // pred_check
        %p246 = pneg %p245
      $region34: #{tpu_custom_call.1} parent=5 // pred_check_branch
        %248 = sbr.rel (%p246) target = $region36
      $region35: #{tpu_custom_call.1} parent=5 // pred_region
        // Predicated region
        $region37: #{tpu_custom_call.1} parent=35 // pred_check
          %p249 = pneg %p50
        $region38: #{tpu_custom_call.1} parent=35 // pred_check_branch
          %251 = sbr.rel (%p249) target = $region40
        $region39: #{tpu_custom_call.1} parent=35 // pred_region
          %s252 = smul.u32 2, %s24
          %p253 = scmp.lt.s32.totalorder %s23, 1
          %s254 = scalar_select %p253, %s23, 1
          %p255 = scmp.lt.s32.totalorder %s252, 1
          %s256 = scalar_select %p255, %s252, 1
          %s257 = smul.addr %s254, 2
          %s258 = sadd.s32 %s256, %s257
          %s259 = smul.addr %s258, 8
          %s260 = scalar_lea.vmem %s0, %s259
          %s261 = smul.u32 2, %s24
        $region40: #{tpu_custom_call.1} parent=35 // pred_fallthru
          _
        // Predicated region
        $region41: #{tpu_custom_call.1} parent=35 // pred_check
          %p262 = pneg %p76
        $region42: #{tpu_custom_call.1} parent=35 // pred_check_branch
          %264 = sbr.rel (%p262) target = $region44
        $region43: #{tpu_custom_call.1} parent=35 // pred_region
          %p265 = scmp.lt.s32.totalorder %s23, 1
          %s266 = scalar_select %p265, %s23, 1
          %s267 = smul.addr %s266, 2
          %s268 = smul.addr %s267, 8
          %s269 = scalar_lea.vmem %s1, %s268
        $region44: #{tpu_custom_call.1} parent=35 // pred_fallthru
          _
      $region36: #{tpu_custom_call.1} parent=5 // pred_fallthru
        _
      %p270 = scmp.le.s32.totalorder 1, %s16
      %p271 = scmp.lt.s32.totalorder %s16, 3
      %p272 = pnand %p270, %p271
      %p273 = pneg %p272
      // Predicated region
      $region45: #{tpu_custom_call.1} parent=5 // pred_check
        _
      $region46: #{tpu_custom_call.1} parent=5 // pred_check_branch
        %275 = sbr.rel (%p272) target = $region48
      $region47: #{tpu_custom_call.1} parent=5 // pred_region
        %s276 = ssub.s32 %s16, 1
        %s277 = smul.u32 2, %s26
        %p278 = scmp.lt.s32.totalorder %s25, 1
        %s279 = scalar_select %p278, %s25, 1
        %p280 = scmp.lt.s32.totalorder %s277, 1
        %s281 = scalar_select %p280, %s277, 1
        %s282 = smul.addr %s279, 2
        %s283 = sadd.s32 %s281, %s282
        %s284 = smul.addr %s283, 8
        %s285 = scalar_lea.vmem %s0, %s284
        %p286 = pneg %p56
        %p287 = pneg %p53
        %p288 = scmp.lt.s32.totalorder %s25, 1
        %s289 = scalar_select %p288, %s25, 1
        %s290 = smul.addr %s289, 2
        %s291 = smul.addr %s290, 8
        %s292 = scalar_lea.vmem %s1, %s291
        %p293 = pneg %p82
        %p294 = pneg %p79
        %p295 = pneg %p103
        %p296 = pneg %p100
        %p297 = pneg %p124
        %p298 = pneg %p121
        %p299 = pneg %p145
        %p300 = pneg %p142
        %p301 = pneg %p166
        %p302 = pneg %p163
        %p303 = pneg %p187
        %p304 = pneg %p184
        %p305 = pneg %p215
        %p306 = pneg %p212
        %s307 = sand.u32 %s202, 1
        %s308 = scalar_lea.sflag [#allocation5], %s307
        %s309 = sand.u32 %s202, 1
        %s310 = smul.addr %s309, 16
        %s311 = scalar_lea.vmem [#allocation4], %s310
        %s312 = smul.u32 2, %s26
        %p313 = scmp.lt.s32.totalorder %s25, 1
        %s314 = scalar_select %p313, %s25, 1
        %p315 = scmp.lt.s32.totalorder %s312, 1
        %s316 = scalar_select %p315, %s312, 1
        %s317 = smul.addr %s314, 2
        %s318 = sadd.s32 %s316, %s317
        %s319 = smul.addr %s318, 8
        %s320 = scalar_lea.vmem %s0, %s319
        %s321 = smul.u32 2, %s26
        %p322 = scmp.lt.s32.totalorder %s25, 1
        %s323 = scalar_select %p322, %s25, 1
        %s324 = smul.addr %s323, 2
        %s325 = smul.addr %s324, 8
        %s326 = scalar_lea.vmem %s1, %s325
        %s327 = smul.u32 2, %s26
        %p328 = scmp.eq.s32.totalorder %s26, 0
        // Predicated region
        $region49: #{tpu_custom_call.1} parent=47 // pred_check
          %p329 = pneg %p328
        $region50: #{tpu_custom_call.1} parent=47 // pred_check_branch
          %331 = sbr.rel (%p329) target = $region52
        $region51: #{tpu_custom_call.1} parent=47 // pred_region
          %v332 = vld [vmem:[%s326] sm:$0xff]
          %v333 = vld [vmem:[%s326 + $0x8] sm:$0xf]
          %v334 = vld [vmem:[%s3] sm:$0xff]
          %v335 = vld [vmem:[%s3 + $0x8] sm:$0xff]
          %v336 = vld [vmem:[%s3 + $0x10] sm:$0xff]
          %v337 = vld [vmem:[%s3 + $0x18] sm:$0xff]
          %v338 = vld [vmem:[%s3 + $0x20] sm:$0xff]
          %v339 = vld [vmem:[%s3 + $0x28] sm:$0xff]
          %vm340 = vcmask 392192
          %v342 = vsel %vm340, %v332, 0
          %v345 = vsel %vm340, %v333, 0
          %347 = vmatprep.subr.mxu0 0.0
          %348 = vmatpush1.msra.mxu0 0.0
          %349 = vmatprep.subr.mxu0 0.0
          %350 = vmatpush1.msra.mxu0 0.0
          %351 = vmatprep.subr.mxu0 0.0
          %352 = vmatpush1.msra.mxu0 0.0
          %353 = vmatprep.subr.mxu0 0.0
          %354 = vmatpush1.msra.mxu0 0.0
          %355 = vmatprep.subr.mxu0 0.0
          %356 = vmatpush1.msra.mxu0 0.0
          %357 = vmatprep.subr.mxu0 0.0
          %358 = vmatpush1.msra.mxu0 0.0
          %359 = vmatprep.subr.mxu0 0.0
          %360 = vmatpush1.msra.mxu0 0.0
          %361 = vmatprep.subr.mxu0 0.0
          %362 = vmatpush1.msra.mxu0 0.0
          %363 = vmatprep.subr.mxu0 0.0
          %364 = vmatpush1.msra.mxu0 0.0
          %365 = vmatprep.subr.mxu0 0.0
          %366 = vmatpush1.msra.mxu0 0.0
          %367 = vmatprep.subr.mxu0 0.0
          %368 = vmatpush1.msra.mxu0 %v339
          %369 = vmatprep.subr.mxu0 0.0
          %370 = vmatpush1.msra.mxu0 %v338
          %371 = vmatprep.subr.mxu0 0.0
          %372 = vmatpush1.msra.mxu0 %v337
          %373 = vmatprep.subr.mxu0 0.0
          %374 = vmatpush1.msra.mxu0 %v336
          %375 = vmatprep.subr.mxu0 0.0
          %376 = vmatpush1.msra.mxu0 %v335
          %377 = vmatprep.subr.mxu0 0.0
          %378 = vmatpush1.msra.mxu0 %v334
          %379 = vmatprep.subr.mxu0 0.0
          %380 = vmatpush2.msra.mxu0 0.0
          %381 = vmatprep.subr.mxu0 0.0
          %382 = vmatpush2.msra.mxu0 0.0
          %383 = vmatprep.subr.mxu0 0.0
          %384 = vmatpush2.msra.mxu0 0.0
          %385 = vmatprep.subr.mxu0 0.0
          %386 = vmatpush2.msra.mxu0 0.0
          %387 = vmatprep.subr.mxu0 0.0
          %388 = vmatpush2.msra.mxu0 0.0
          %389 = vmatprep.subr.mxu0 0.0
          %390 = vmatpush2.msra.mxu0 0.0
          %391 = vmatprep.subr.mxu0 0.0
          %392 = vmatpush2.msra.mxu0 0.0
          %393 = vmatprep.subr.mxu0 0.0
          %394 = vmatpush2.msra.mxu0 0.0
          %395 = vmatprep.subr.mxu0 0.0
          %396 = vmatpush2.msra.mxu0 0.0
          %397 = vmatprep.subr.mxu0 0.0
          %398 = vmatpush2.msra.mxu0 0.0
          %399 = vmatprep.subr.mxu0 0.0
          %400 = vmatpush2.msra.mxu0 0.0
          %401 = vmatprep.subr.mxu0 0.0
          %402 = vmatpush2.msra.mxu0 0.0
          %403 = vmatprep.subr.mxu0 0.0
          %404 = vmatpush2.msra.mxu0 0.0
          %405 = vmatprep.subr.mxu0 0.0
          %406 = vmatpush2.msra.mxu0 0.0
          %407 = vmatprep.subr.mxu0 0.0
          %408 = vmatpush2.msra.mxu0 0.0
          %409 = vmatprep.subr.mxu0 0.0
          %410 = vmatpush2.msra.mxu0 0.0
          %411 = vmatprep.mubr.f32.mxu0 0.0
          %412 = vmatmul.mubr.f32.gmra.mxu0 %v342
          %v413 = vpop.f32.mrf.mxu0
          %v414 = vadd.f32 0.0, %v413
          %v415 = vpop.f32.mrf.mxu0
          %416 = vmatprep.mubr.f32.mxu0 0.0
          %417 = vmatmul.mubr.f32.gmra.mxu0 %v345
          %v418 = vpop.f32.mrf.mxu0
          %v419 = vadd.f32 0.0, %v418
          %v420 = vpop.f32.mrf.mxu0
          %421 = vdwg.mxu0
          %vm422 = vcmask 261120
          %423 = vst.msk [vmem:[#allocation2] sm:$0xff] %vm422, %v414
          %vm424 = vcmask 257024
          %425 = vst.msk [vmem:[#allocation2 + $0x8] sm:$0xf] %vm424, %v419
          %v426 = vld [vmem:[%s4] sm:$0xff]
          %v427 = vld [vmem:[%s4 + $0x8] sm:$0xff]
          %v428 = vld [vmem:[%s4 + $0x10] sm:$0xff]
          %v429 = vld [vmem:[%s4 + $0x18] sm:$0xff]
          %v430 = vld [vmem:[%s4 + $0x20] sm:$0xff]
          %v431 = vld [vmem:[%s4 + $0x28] sm:$0xff]
          %432 = vmatprep.subr.mxu0 0.0
          %433 = vmatpush1.msra.mxu0 0.0
          %434 = vmatprep.subr.mxu0 0.0
          %435 = vmatpush1.msra.mxu0 0.0
          %436 = vmatprep.subr.mxu0 0.0
          %437 = vmatpush1.msra.mxu0 0.0
          %438 = vmatprep.subr.mxu0 0.0
          %439 = vmatpush1.msra.mxu0 0.0
          %440 = vmatprep.subr.mxu0 0.0
          %441 = vmatpush1.msra.mxu0 0.0
          %442 = vmatprep.subr.mxu0 0.0
          %443 = vmatpush1.msra.mxu0 0.0
          %444 = vmatprep.subr.mxu0 0.0
          %445 = vmatpush1.msra.mxu0 0.0
          %446 = vmatprep.subr.mxu0 0.0
          %447 = vmatpush1.msra.mxu0 0.0
          %448 = vmatprep.subr.mxu0 0.0
          %449 = vmatpush1.msra.mxu0 0.0
          %450 = vmatprep.subr.mxu0 0.0
          %451 = vmatpush1.msra.mxu0 0.0
          %452 = vmatprep.subr.mxu0 0.0
          %453 = vmatpush1.msra.mxu0 %v431
          %454 = vmatprep.subr.mxu0 0.0
          %455 = vmatpush1.msra.mxu0 %v430
          %456 = vmatprep.subr.mxu0 0.0
          %457 = vmatpush1.msra.mxu0 %v429
          %458 = vmatprep.subr.mxu0 0.0
          %459 = vmatpush1.msra.mxu0 %v428
          %460 = vmatprep.subr.mxu0 0.0
          %461 = vmatpush1.msra.mxu0 %v427
          %462 = vmatprep.subr.mxu0 0.0
          %463 = vmatpush1.msra.mxu0 %v426
          %464 = vmatprep.subr.mxu0 0.0
          %465 = vmatpush2.msra.mxu0 0.0
          %466 = vmatprep.subr.mxu0 0.0
          %467 = vmatpush2.msra.mxu0 0.0
          %468 = vmatprep.subr.mxu0 0.0
          %469 = vmatpush2.msra.mxu0 0.0
          %470 = vmatprep.subr.mxu0 0.0
          %471 = vmatpush2.msra.mxu0 0.0
          %472 = vmatprep.subr.mxu0 0.0
          %473 = vmatpush2.msra.mxu0 0.0
          %474 = vmatprep.subr.mxu0 0.0
          %475 = vmatpush2.msra.mxu0 0.0
          %476 = vmatprep.subr.mxu0 0.0
          %477 = vmatpush2.msra.mxu0 0.0
          %478 = vmatprep.subr.mxu0 0.0
          %479 = vmatpush2.msra.mxu0 0.0
          %480 = vmatprep.subr.mxu0 0.0
          %481 = vmatpush2.msra.mxu0 0.0
          %482 = vmatprep.subr.mxu0 0.0
          %483 = vmatpush2.msra.mxu0 0.0
          %484 = vmatprep.subr.mxu0 0.0
          %485 = vmatpush2.msra.mxu0 0.0
          %486 = vmatprep.subr.mxu0 0.0
          %487 = vmatpush2.msra.mxu0 0.0
          %488 = vmatprep.subr.mxu0 0.0
          %489 = vmatpush2.msra.mxu0 0.0
          %490 = vmatprep.subr.mxu0 0.0
          %491 = vmatpush2.msra.mxu0 0.0
          %492 = vmatprep.subr.mxu0 0.0
          %493 = vmatpush2.msra.mxu0 0.0
          %494 = vmatprep.subr.mxu0 0.0
          %495 = vmatpush2.msra.mxu0 0.0
          %496 = vmatprep.mubr.f32.mxu0 0.0
          %497 = vmatmul.mubr.f32.gmra.mxu0 %v342
          %v498 = vpop.f32.mrf.mxu0
          %v499 = vadd.f32 0.0, %v498
          %v500 = vpop.f32.mrf.mxu0
          %501 = vmatprep.mubr.f32.mxu0 0.0
          %502 = vmatmul.mubr.f32.gmra.mxu0 %v345
          %v503 = vpop.f32.mrf.mxu0
          %v504 = vadd.f32 0.0, %v503
          %v505 = vpop.f32.mrf.mxu0
          %506 = vdwg.mxu0
          %507 = vst.msk [vmem:[#allocation3] sm:$0xff] %vm422, %v499
          %508 = vst.msk [vmem:[#allocation3 + $0x8] sm:$0xf] %vm424, %v504
        $region52: #{tpu_custom_call.1} parent=47 // pred_fallthru
          _
        %v509 = vld [vmem:[%s320] sm:$0xff]
        %v510 = vld [vmem:[%s320 + $0x8] sm:$0xff]
        %v511 = vld [vmem:[%s2] sm:$0xff]
        %v512 = vld [vmem:[%s2 + $0x8] sm:$0xff]
        %v513 = vld [vmem:[%s2 + $0x10] sm:$0xff]
        %v514 = vld [vmem:[%s2 + $0x18] sm:$0xff]
        %vm515 = vcmask 261120
        %v517 = vsel %vm515, %v509, 0
        %v520 = vsel %vm515, %v510, 0
        %522 = vmatprep.subr.mxu0 0.0
        %523 = vmatpush1.msra.mxu0 0.0
        %524 = vmatprep.subr.mxu0 0.0
        %525 = vmatpush1.msra.mxu0 0.0
        %526 = vmatprep.subr.mxu0 0.0
        %527 = vmatpush1.msra.mxu0 0.0
        %528 = vmatprep.subr.mxu0 0.0
        %529 = vmatpush1.msra.mxu0 0.0
        %530 = vmatprep.subr.mxu0 0.0
        %531 = vmatpush1.msra.mxu0 0.0
        %532 = vmatprep.subr.mxu0 0.0
        %533 = vmatpush1.msra.mxu0 0.0
        %534 = vmatprep.subr.mxu0 0.0
        %535 = vmatpush1.msra.mxu0 0.0
        %536 = vmatprep.subr.mxu0 0.0
        %537 = vmatpush1.msra.mxu0 0.0
        %538 = vmatprep.subr.mxu0 0.0
        %539 = vmatpush1.msra.mxu0 0.0
        %540 = vmatprep.subr.mxu0 0.0
        %541 = vmatpush1.msra.mxu0 0.0
        %542 = vmatprep.subr.mxu0 0.0
        %543 = vmatpush1.msra.mxu0 0.0
        %544 = vmatprep.subr.mxu0 0.0
        %545 = vmatpush1.msra.mxu0 0.0
        %546 = vmatprep.subr.mxu0 0.0
        %547 = vmatpush1.msra.mxu0 %v514
        %548 = vmatprep.subr.mxu0 0.0
        %549 = vmatpush1.msra.mxu0 %v513
        %550 = vmatprep.subr.mxu0 0.0
        %551 = vmatpush1.msra.mxu0 %v512
        %552 = vmatprep.subr.mxu0 0.0
        %553 = vmatpush1.msra.mxu0 %v511
        %554 = vmatprep.subr.mxu0 0.0
        %555 = vmatpush2.msra.mxu0 0.0
        %556 = vmatprep.subr.mxu0 0.0
        %557 = vmatpush2.msra.mxu0 0.0
        %558 = vmatprep.subr.mxu0 0.0
        %559 = vmatpush2.msra.mxu0 0.0
        %560 = vmatprep.subr.mxu0 0.0
        %561 = vmatpush2.msra.mxu0 0.0
        %562 = vmatprep.subr.mxu0 0.0
        %563 = vmatpush2.msra.mxu0 0.0
        %564 = vmatprep.subr.mxu0 0.0
        %565 = vmatpush2.msra.mxu0 0.0
        %566 = vmatprep.subr.mxu0 0.0
        %567 = vmatpush2.msra.mxu0 0.0
        %568 = vmatprep.subr.mxu0 0.0
        %569 = vmatpush2.msra.mxu0 0.0
        %570 = vmatprep.subr.mxu0 0.0
        %571 = vmatpush2.msra.mxu0 0.0
        %572 = vmatprep.subr.mxu0 0.0
        %573 = vmatpush2.msra.mxu0 0.0
        %574 = vmatprep.subr.mxu0 0.0
        %575 = vmatpush2.msra.mxu0 0.0
        %576 = vmatprep.subr.mxu0 0.0
        %577 = vmatpush2.msra.mxu0 0.0
        %578 = vmatprep.subr.mxu0 0.0
        %579 = vmatpush2.msra.mxu0 0.0
        %580 = vmatprep.subr.mxu0 0.0
        %581 = vmatpush2.msra.mxu0 0.0
        %582 = vmatprep.subr.mxu0 0.0
        %583 = vmatpush2.msra.mxu0 0.0
        %584 = vmatprep.subr.mxu0 0.0
        %585 = vmatpush2.msra.mxu0 0.0
        %586 = vmatprep.mubr.f32.mxu0 0.0
        %587 = vmatmul.mubr.f32.gmra.mxu0 %v517
        %v588 = vpop.f32.mrf.mxu0
        %v589 = vadd.f32 0.0, %v588
        %v590 = vpop.f32.mrf.mxu0
        %591 = vmatprep.mubr.f32.mxu0 0.0
        %592 = vmatmul.mubr.f32.gmra.mxu0 %v520
        %v593 = vpop.f32.mrf.mxu0
        %v594 = vadd.f32 0.0, %v593
        %v595 = vpop.f32.mrf.mxu0
        %596 = vdwg.mxu0
        %v597 = vld [vmem:[#allocation2] sm:$0xff]
        %v598 = vld [vmem:[#allocation2 + $0x8] sm:$0xf]
        %v599 = vld [vmem:[#allocation3] sm:$0xff]
        %v600 = vld [vmem:[#allocation3 + $0x8] sm:$0xf]
        %vm601 = vcmask 130048
        %v603 = vsel %vm601, %v589, 0
        %v606 = vsel %vm601, %v594, 0
        %v609 = vsel %vm601, %v597, 0
        %v612 = vsel %vm601, %v598, 0
        %614 = vmatprep.subr.mxu0 0.0
        %615 = vmatpush1.xpose.msra.mxu0 0.0
        %616 = vmatprep.subr.mxu0 0.0
        %617 = vmatpush1.xpose.msra.mxu0 0.0
        %618 = vmatprep.subr.mxu0 0.0
        %619 = vmatpush1.xpose.msra.mxu0 0.0
        %620 = vmatprep.subr.mxu0 0.0
        %621 = vmatpush1.xpose.msra.mxu0 0.0
        %622 = vmatprep.subr.mxu0 0.0
        %623 = vmatpush1.xpose.msra.mxu0 0.0
        %624 = vmatprep.subr.mxu0 0.0
        %625 = vmatpush1.xpose.msra.mxu0 0.0
        %626 = vmatprep.subr.mxu0 0.0
        %627 = vmatpush1.xpose.msra.mxu0 0.0
        %628 = vmatprep.subr.mxu0 0.0
        %629 = vmatpush1.xpose.msra.mxu0 0.0
        %630 = vmatprep.subr.mxu0 0.0
        %631 = vmatpush1.xpose.msra.mxu0 0.0
        %632 = vmatprep.subr.mxu0 0.0
        %633 = vmatpush1.xpose.msra.mxu0 0.0
        %634 = vmatprep.subr.mxu0 0.0
        %635 = vmatpush1.xpose.msra.mxu0 0.0
        %636 = vmatprep.subr.mxu0 0.0
        %637 = vmatpush1.xpose.msra.mxu0 0.0
        %638 = vmatprep.subr.mxu0 0.0
        %639 = vmatpush1.xpose.msra.mxu0 0.0
        %640 = vmatprep.subr.mxu0 0.0
        %641 = vmatpush1.xpose.msra.mxu0 0.0
        %642 = vmatprep.subr.mxu0 0.0
        %643 = vmatpush1.xpose.msra.mxu0 %v612
        %644 = vmatprep.subr.mxu0 0.0
        %645 = vmatpush1.xpose.msra.mxu0 %v609
        %646 = vmatprep.subr.mxu0 0.0
        %647 = vmatpush2.xpose.msra.mxu0 0.0
        %648 = vmatprep.subr.mxu0 0.0
        %649 = vmatpush2.xpose.msra.mxu0 0.0
        %650 = vmatprep.subr.mxu0 0.0
        %651 = vmatpush2.xpose.msra.mxu0 0.0
        %652 = vmatprep.subr.mxu0 0.0
        %653 = vmatpush2.xpose.msra.mxu0 0.0
        %654 = vmatprep.subr.mxu0 0.0
        %655 = vmatpush2.xpose.msra.mxu0 0.0
        %656 = vmatprep.subr.mxu0 0.0
        %657 = vmatpush2.xpose.msra.mxu0 0.0
        %658 = vmatprep.subr.mxu0 0.0
        %659 = vmatpush2.xpose.msra.mxu0 0.0
        %660 = vmatprep.subr.mxu0 0.0
        %661 = vmatpush2.xpose.msra.mxu0 0.0
        %662 = vmatprep.subr.mxu0 0.0
        %663 = vmatpush2.xpose.msra.mxu0 0.0
        %664 = vmatprep.subr.mxu0 0.0
        %665 = vmatpush2.xpose.msra.mxu0 0.0
        %666 = vmatprep.subr.mxu0 0.0
        %667 = vmatpush2.xpose.msra.mxu0 0.0
        %668 = vmatprep.subr.mxu0 0.0
        %669 = vmatpush2.xpose.msra.mxu0 0.0
        %670 = vmatprep.subr.mxu0 0.0
        %671 = vmatpush2.xpose.msra.mxu0 0.0
        %672 = vmatprep.subr.mxu0 0.0
        %673 = vmatpush2.xpose.msra.mxu0 0.0
        %674 = vmatprep.subr.mxu0 0.0
        %675 = vmatpush2.xpose.msra.mxu0 0.0
        %676 = vmatprep.subr.mxu0 0.0
        %677 = vmatpush2.xpose.msra.mxu0 0.0
        %678 = vmatprep.mubr.f32.mxu0 0.0
        %679 = vmatmul.mubr.f32.gmra.mxu0 %v603
        %v680 = vpop.f32.mrf.mxu0
        %v681 = vadd.f32 0.0, %v680
        %v682 = vpop.f32.mrf.mxu0
        %683 = vmatprep.mubr.f32.mxu0 0.0
        %684 = vmatmul.mubr.f32.gmra.mxu0 %v606
        %v685 = vpop.f32.mrf.mxu0
        %v686 = vadd.f32 0.0, %v685
        %v687 = vpop.f32.mrf.mxu0
        %688 = vdwg.mxu0
        %vm689 = vcmask 97280
        %v690 = vsel %vm689, %v681, -inf
        %691 = vmax.xlane.f32.xlu0 %v690
        %v692 = vpop.xlane.xlu0 %691
        %v693 = vsel %vm689, %v686, -inf
        %694 = vmax.xlane.f32.xlu0 %v693
        %v695 = vpop.xlane.xlu0 %694
        %v696 = vsub.f32 %v681, %v692
        %v697 = vsub.f32 %v686, %v695
        %v698 = vmul.f32 %v696, 1.442695
        %v699 = vpow.pop %v698
        %v700 = vmul.f32 %v697, 1.442695
        %v701 = vpow.pop %v700
        %v702 = vsel %vm689, %v699, 0.0
        %703 = vadd.xlane.f32.xlu0 %v702
        %v704 = vpop.xlane.xlu0 %703
        %v705 = vsel %vm689, %v701, 0.0
        %706 = vadd.xlane.f32.xlu0 %v705
        %v707 = vpop.xlane.xlu0 %706
        %v708 = vrcp.pop %v704
        %v709 = vmul.f32 %v699, %v708
        %v710 = vrcp.pop %v707
        %v711 = vmul.f32 %v701, %v710
        %v713 = vsel %vm689, %v709, 0
        %v716 = vsel %vm689, %v711, 0
        %vm718 = vcmask 1043456
        %v720 = vsel %vm718, %v600, 0
        %722 = vmatprep.subr.mxu0 0.0
        %723 = vmatpush1.msra.mxu0 0.0
        %724 = vmatprep.subr.mxu0 0.0
        %725 = vmatpush1.msra.mxu0 0.0
        %726 = vmatprep.subr.mxu0 0.0
        %727 = vmatpush1.msra.mxu0 0.0
        %728 = vmatprep.subr.mxu0 0.0
        %729 = vmatpush1.msra.mxu0 0.0
        %730 = vmatprep.subr.mxu0 0.0
        %731 = vmatpush1.msra.mxu0 0.0
        %732 = vmatprep.subr.mxu0 0.0
        %733 = vmatpush1.msra.mxu0 0.0
        %734 = vmatprep.subr.mxu0 0.0
        %735 = vmatpush1.msra.mxu0 0.0
        %736 = vmatprep.subr.mxu0 0.0
        %737 = vmatpush1.msra.mxu0 0.0
        %738 = vmatprep.subr.mxu0 0.0
        %739 = vmatpush1.msra.mxu0 0.0
        %740 = vmatprep.subr.mxu0 0.0
        %741 = vmatpush1.msra.mxu0 0.0
        %742 = vmatprep.subr.mxu0 0.0
        %743 = vmatpush1.msra.mxu0 0.0
        %744 = vmatprep.subr.mxu0 0.0
        %745 = vmatpush1.msra.mxu0 0.0
        %746 = vmatprep.subr.mxu0 0.0
        %747 = vmatpush1.msra.mxu0 0.0
        %748 = vmatprep.subr.mxu0 0.0
        %749 = vmatpush1.msra.mxu0 0.0
        %750 = vmatprep.subr.mxu0 0.0
        %751 = vmatpush1.msra.mxu0 %v720
        %752 = vmatprep.subr.mxu0 0.0
        %753 = vmatpush1.msra.mxu0 %v599
        %754 = vmatprep.subr.mxu0 0.0
        %755 = vmatpush2.msra.mxu0 0.0
        %756 = vmatprep.subr.mxu0 0.0
        %757 = vmatpush2.msra.mxu0 0.0
        %758 = vmatprep.subr.mxu0 0.0
        %759 = vmatpush2.msra.mxu0 0.0
        %760 = vmatprep.subr.mxu0 0.0
        %761 = vmatpush2.msra.mxu0 0.0
        %762 = vmatprep.subr.mxu0 0.0
        %763 = vmatpush2.msra.mxu0 0.0
        %764 = vmatprep.subr.mxu0 0.0
        %765 = vmatpush2.msra.mxu0 0.0
        %766 = vmatprep.subr.mxu0 0.0
        %767 = vmatpush2.msra.mxu0 0.0
        %768 = vmatprep.subr.mxu0 0.0
        %769 = vmatpush2.msra.mxu0 0.0
        %770 = vmatprep.subr.mxu0 0.0
        %771 = vmatpush2.msra.mxu0 0.0
        %772 = vmatprep.subr.mxu0 0.0
        %773 = vmatpush2.msra.mxu0 0.0
        %774 = vmatprep.subr.mxu0 0.0
        %775 = vmatpush2.msra.mxu0 0.0
        %776 = vmatprep.subr.mxu0 0.0
        %777 = vmatpush2.msra.mxu0 0.0
        %778 = vmatprep.subr.mxu0 0.0
        %779 = vmatpush2.msra.mxu0 0.0
        %780 = vmatprep.subr.mxu0 0.0
        %781 = vmatpush2.msra.mxu0 0.0
        %782 = vmatprep.subr.mxu0 0.0
        %783 = vmatpush2.msra.mxu0 0.0
        %784 = vmatprep.subr.mxu0 0.0
        %785 = vmatpush2.msra.mxu0 0.0
        %786 = vmatprep.mubr.f32.mxu0 0.0
        %787 = vmatmul.mubr.f32.gmra.mxu0 %v713
        %v788 = vpop.f32.mrf.mxu0
        %v789 = vadd.f32 0.0, %v788
        %v790 = vpop.f32.mrf.mxu0
        %791 = vmatprep.mubr.f32.mxu0 0.0
        %792 = vmatmul.mubr.f32.gmra.mxu0 %v716
        %v793 = vpop.f32.mrf.mxu0
        %v794 = vadd.f32 0.0, %v793
        %v795 = vpop.f32.mrf.mxu0
        %796 = vdwg.mxu0
        %v797 = vld [vmem:[%s5] sm:$0xff]
        %v798 = vld [vmem:[%s5 + $0x8] sm:$0xff]
        %799 = vrot.lane.b32.xlu0 %v589, 112
        %v800 = vpop.permute.xlu0 %799
        %801 = vrot.lane.b32.xlu0 %v594, 112
        %v802 = vpop.permute.xlu0 %801
        %803 = vrot.lane.b32.xlu0 %v597, 112
        %v804 = vpop.permute.xlu0 %803
        %805 = vrot.lane.b32.xlu0 %v598, 112
        %v806 = vpop.permute.xlu0 %805
        %v807 = vsel %vm601, %v800, 0
        %v809 = vsel %vm601, %v802, 0
        %v811 = vsel %vm601, %v804, 0
        %v813 = vsel %vm601, %v806, 0
        %815 = vmatprep.subr.mxu0 0.0
        %816 = vmatpush1.xpose.msra.mxu0 0.0
        %817 = vmatprep.subr.mxu0 0.0
        %818 = vmatpush1.xpose.msra.mxu0 0.0
        %819 = vmatprep.subr.mxu0 0.0
        %820 = vmatpush1.xpose.msra.mxu0 0.0
        %821 = vmatprep.subr.mxu0 0.0
        %822 = vmatpush1.xpose.msra.mxu0 0.0
        %823 = vmatprep.subr.mxu0 0.0
        %824 = vmatpush1.xpose.msra.mxu0 0.0
        %825 = vmatprep.subr.mxu0 0.0
        %826 = vmatpush1.xpose.msra.mxu0 0.0
        %827 = vmatprep.subr.mxu0 0.0
        %828 = vmatpush1.xpose.msra.mxu0 0.0
        %829 = vmatprep.subr.mxu0 0.0
        %830 = vmatpush1.xpose.msra.mxu0 0.0
        %831 = vmatprep.subr.mxu0 0.0
        %832 = vmatpush1.xpose.msra.mxu0 0.0
        %833 = vmatprep.subr.mxu0 0.0
        %834 = vmatpush1.xpose.msra.mxu0 0.0
        %835 = vmatprep.subr.mxu0 0.0
        %836 = vmatpush1.xpose.msra.mxu0 0.0
        %837 = vmatprep.subr.mxu0 0.0
        %838 = vmatpush1.xpose.msra.mxu0 0.0
        %839 = vmatprep.subr.mxu0 0.0
        %840 = vmatpush1.xpose.msra.mxu0 0.0
        %841 = vmatprep.subr.mxu0 0.0
        %842 = vmatpush1.xpose.msra.mxu0 0.0
        %843 = vmatprep.subr.mxu0 0.0
        %844 = vmatpush1.xpose.msra.mxu0 %v813
        %845 = vmatprep.subr.mxu0 0.0
        %846 = vmatpush1.xpose.msra.mxu0 %v811
        %847 = vmatprep.subr.mxu0 0.0
        %848 = vmatpush2.xpose.msra.mxu0 0.0
        %849 = vmatprep.subr.mxu0 0.0
        %850 = vmatpush2.xpose.msra.mxu0 0.0
        %851 = vmatprep.subr.mxu0 0.0
        %852 = vmatpush2.xpose.msra.mxu0 0.0
        %853 = vmatprep.subr.mxu0 0.0
        %854 = vmatpush2.xpose.msra.mxu0 0.0
        %855 = vmatprep.subr.mxu0 0.0
        %856 = vmatpush2.xpose.msra.mxu0 0.0
        %857 = vmatprep.subr.mxu0 0.0
        %858 = vmatpush2.xpose.msra.mxu0 0.0
        %859 = vmatprep.subr.mxu0 0.0
        %860 = vmatpush2.xpose.msra.mxu0 0.0
        %861 = vmatprep.subr.mxu0 0.0
        %862 = vmatpush2.xpose.msra.mxu0 0.0
        %863 = vmatprep.subr.mxu0 0.0
        %864 = vmatpush2.xpose.msra.mxu0 0.0
        %865 = vmatprep.subr.mxu0 0.0
        %866 = vmatpush2.xpose.msra.mxu0 0.0
        %867 = vmatprep.subr.mxu0 0.0
        %868 = vmatpush2.xpose.msra.mxu0 0.0
        %869 = vmatprep.subr.mxu0 0.0
        %870 = vmatpush2.xpose.msra.mxu0 0.0
        %871 = vmatprep.subr.mxu0 0.0
        %872 = vmatpush2.xpose.msra.mxu0 0.0
        %873 = vmatprep.subr.mxu0 0.0
        %874 = vmatpush2.xpose.msra.mxu0 0.0
        %875 = vmatprep.subr.mxu0 0.0
        %876 = vmatpush2.xpose.msra.mxu0 0.0
        %877 = vmatprep.subr.mxu0 0.0
        %878 = vmatpush2.xpose.msra.mxu0 0.0
        %879 = vmatprep.mubr.f32.mxu0 0.0
        %880 = vmatmul.mubr.f32.gmra.mxu0 %v807
        %v881 = vpop.f32.mrf.mxu0
        %v882 = vadd.f32 0.0, %v881
        %v883 = vpop.f32.mrf.mxu0
        %884 = vmatprep.mubr.f32.mxu0 0.0
        %885 = vmatmul.mubr.f32.gmra.mxu0 %v809
        %v886 = vpop.f32.mrf.mxu0
        %v887 = vadd.f32 0.0, %v886
        %v888 = vpop.f32.mrf.mxu0
        %889 = vdwg.mxu0
        %v890 = vsel %vm689, %v882, -inf
        %891 = vmax.xlane.f32.xlu0 %v890
        %v892 = vpop.xlane.xlu0 %891
        %v893 = vsel %vm689, %v887, -inf
        %894 = vmax.xlane.f32.xlu0 %v893
        %v895 = vpop.xlane.xlu0 %894
        %v896 = vsub.f32 %v882, %v892
        %v897 = vsub.f32 %v887, %v895
        %v898 = vmul.f32 %v896, 1.442695
        %v899 = vpow.pop %v898
        %v900 = vmul.f32 %v897, 1.442695
        %v901 = vpow.pop %v900
        %v902 = vsel %vm689, %v899, 0.0
        %903 = vadd.xlane.f32.xlu0 %v902
        %v904 = vpop.xlane.xlu0 %903
        %v905 = vsel %vm689, %v901, 0.0
        %906 = vadd.xlane.f32.xlu0 %v905
        %v907 = vpop.xlane.xlu0 %906
        %v908 = vrcp.pop %v904
        %v909 = vmul.f32 %v899, %v908
        %v910 = vrcp.pop %v907
        %v911 = vmul.f32 %v901, %v910
        %913 = vrot.lane.b32.xlu0 %v599, 112
        %v914 = vpop.permute.xlu0 %913
        %915 = vrot.lane.b32.xlu0 %v600, 112
        %v916 = vpop.permute.xlu0 %915
        %v919 = vsel %vm689, %v909, 0
        %v922 = vsel %vm689, %v911, 0
        %v924 = vsel %vm718, %v916, 0
        %926 = vmatprep.subr.mxu0 0.0
        %927 = vmatpush1.msra.mxu0 0.0
        %928 = vmatprep.subr.mxu0 0.0
        %929 = vmatpush1.msra.mxu0 0.0
        %930 = vmatprep.subr.mxu0 0.0
        %931 = vmatpush1.msra.mxu0 0.0
        %932 = vmatprep.subr.mxu0 0.0
        %933 = vmatpush1.msra.mxu0 0.0
        %934 = vmatprep.subr.mxu0 0.0
        %935 = vmatpush1.msra.mxu0 0.0
        %936 = vmatprep.subr.mxu0 0.0
        %937 = vmatpush1.msra.mxu0 0.0
        %938 = vmatprep.subr.mxu0 0.0
        %939 = vmatpush1.msra.mxu0 0.0
        %940 = vmatprep.subr.mxu0 0.0
        %941 = vmatpush1.msra.mxu0 0.0
        %942 = vmatprep.subr.mxu0 0.0
        %943 = vmatpush1.msra.mxu0 0.0
        %944 = vmatprep.subr.mxu0 0.0
        %945 = vmatpush1.msra.mxu0 0.0
        %946 = vmatprep.subr.mxu0 0.0
        %947 = vmatpush1.msra.mxu0 0.0
        %948 = vmatprep.subr.mxu0 0.0
        %949 = vmatpush1.msra.mxu0 0.0
        %950 = vmatprep.subr.mxu0 0.0
        %951 = vmatpush1.msra.mxu0 0.0
        %952 = vmatprep.subr.mxu0 0.0
        %953 = vmatpush1.msra.mxu0 0.0
        %954 = vmatprep.subr.mxu0 0.0
        %955 = vmatpush1.msra.mxu0 %v924
        %956 = vmatprep.subr.mxu0 0.0
        %957 = vmatpush1.msra.mxu0 %v914
        %958 = vmatprep.subr.mxu0 0.0
        %959 = vmatpush2.msra.mxu0 0.0
        %960 = vmatprep.subr.mxu0 0.0
        %961 = vmatpush2.msra.mxu0 0.0
        %962 = vmatprep.subr.mxu0 0.0
        %963 = vmatpush2.msra.mxu0 0.0
        %964 = vmatprep.subr.mxu0 0.0
        %965 = vmatpush2.msra.mxu0 0.0
        %966 = vmatprep.subr.mxu0 0.0
        %967 = vmatpush2.msra.mxu0 0.0
        %968 = vmatprep.subr.mxu0 0.0
        %969 = vmatpush2.msra.mxu0 0.0
        %970 = vmatprep.subr.mxu0 0.0
        %971 = vmatpush2.msra.mxu0 0.0
        %972 = vmatprep.subr.mxu0 0.0
        %973 = vmatpush2.msra.mxu0 0.0
        %974 = vmatprep.subr.mxu0 0.0
        %975 = vmatpush2.msra.mxu0 0.0
        %976 = vmatprep.subr.mxu0 0.0
        %977 = vmatpush2.msra.mxu0 0.0
        %978 = vmatprep.subr.mxu0 0.0
        %979 = vmatpush2.msra.mxu0 0.0
        %980 = vmatprep.subr.mxu0 0.0
        %981 = vmatpush2.msra.mxu0 0.0
        %982 = vmatprep.subr.mxu0 0.0
        %983 = vmatpush2.msra.mxu0 0.0
        %984 = vmatprep.subr.mxu0 0.0
        %985 = vmatpush2.msra.mxu0 0.0
        %986 = vmatprep.subr.mxu0 0.0
        %987 = vmatpush2.msra.mxu0 0.0
        %988 = vmatprep.subr.mxu0 0.0
        %989 = vmatpush2.msra.mxu0 0.0
        %990 = vmatprep.mubr.f32.mxu0 0.0
        %991 = vmatmul.mubr.f32.gmra.mxu0 %v919
        %v992 = vpop.f32.mrf.mxu0
        %v993 = vadd.f32 0.0, %v992
        %v994 = vpop.f32.mrf.mxu0
        %995 = vmatprep.mubr.f32.mxu0 0.0
        %996 = vmatmul.mubr.f32.gmra.mxu0 %v922
        %v997 = vpop.f32.mrf.mxu0
        %v998 = vadd.f32 0.0, %v997
        %v999 = vpop.f32.mrf.mxu0
        %1000 = vdwg.mxu0
        %v1001 = vld [vmem:[%s5 + $0x10] sm:$0xff]
        %v1002 = vld [vmem:[%s5 + $0x18] sm:$0xff]
        %v1004 = vsel %vm601, %v993, 0
        %v1007 = vsel %vm601, %v998, 0
        %1009 = vmatprep.subr.mxu0 0.0
        %1010 = vmatpush1.msra.mxu0 0.0
        %1011 = vmatprep.subr.mxu0 0.0
        %1012 = vmatpush1.msra.mxu0 0.0
        %1013 = vmatprep.subr.mxu0 0.0
        %1014 = vmatpush1.msra.mxu0 0.0
        %1015 = vmatprep.subr.mxu0 0.0
        %1016 = vmatpush1.msra.mxu0 0.0
        %1017 = vmatprep.subr.mxu0 0.0
        %1018 = vmatpush1.msra.mxu0 0.0
        %1019 = vmatprep.subr.mxu0 0.0
        %1020 = vmatpush1.msra.mxu0 0.0
        %1021 = vmatprep.subr.mxu0 0.0
        %1022 = vmatpush1.msra.mxu0 0.0
        %1023 = vmatprep.subr.mxu0 0.0
        %1024 = vmatpush1.msra.mxu0 0.0
        %1025 = vmatprep.subr.mxu0 0.0
        %1026 = vmatpush1.msra.mxu0 0.0
        %1027 = vmatprep.subr.mxu0 0.0
        %1028 = vmatpush1.msra.mxu0 0.0
        %1029 = vmatprep.subr.mxu0 0.0
        %1030 = vmatpush1.msra.mxu0 0.0
        %1031 = vmatprep.subr.mxu0 0.0
        %1032 = vmatpush1.msra.mxu0 0.0
        %1033 = vmatprep.subr.mxu0 0.0
        %1034 = vmatpush1.msra.mxu0 0.0
        %1035 = vmatprep.subr.mxu0 0.0
        %1036 = vmatpush1.msra.mxu0 0.0
        %1037 = vmatprep.subr.mxu0 0.0
        %1038 = vmatpush1.msra.mxu0 %v1002
        %1039 = vmatprep.subr.mxu0 0.0
        %1040 = vmatpush1.msra.mxu0 %v1001
        %1041 = vmatprep.subr.mxu0 0.0
        %1042 = vmatpush2.msra.mxu0 0.0
        %1043 = vmatprep.subr.mxu0 0.0
        %1044 = vmatpush2.msra.mxu0 0.0
        %1045 = vmatprep.subr.mxu0 0.0
        %1046 = vmatpush2.msra.mxu0 0.0
        %1047 = vmatprep.subr.mxu0 0.0
        %1048 = vmatpush2.msra.mxu0 0.0
        %1049 = vmatprep.subr.mxu0 0.0
        %1050 = vmatpush2.msra.mxu0 0.0
        %1051 = vmatprep.subr.mxu0 0.0
        %1052 = vmatpush2.msra.mxu0 0.0
        %1053 = vmatprep.subr.mxu0 0.0
        %1054 = vmatpush2.msra.mxu0 0.0
        %1055 = vmatprep.subr.mxu0 0.0
        %1056 = vmatpush2.msra.mxu0 0.0
        %1057 = vmatprep.subr.mxu0 0.0
        %1058 = vmatpush2.msra.mxu0 0.0
        %1059 = vmatprep.subr.mxu0 0.0
        %1060 = vmatpush2.msra.mxu0 0.0
        %1061 = vmatprep.subr.mxu0 0.0
        %1062 = vmatpush2.msra.mxu0 0.0
        %1063 = vmatprep.subr.mxu0 0.0
        %1064 = vmatpush2.msra.mxu0 0.0
        %1065 = vmatprep.subr.mxu0 0.0
        %1066 = vmatpush2.msra.mxu0 0.0
        %1067 = vmatprep.subr.mxu0 0.0
        %1068 = vmatpush2.msra.mxu0 0.0
        %1069 = vmatprep.subr.mxu0 0.0
        %1070 = vmatpush2.msra.mxu0 0.0
        %1071 = vmatprep.subr.mxu0 0.0
        %1072 = vmatpush2.msra.mxu0 0.0
        %1073 = vmatprep.mubr.f32.mxu0 0.0
        %1074 = vmatmul.mubr.f32.gmra.mxu0 %v1004
        %v1075 = vpop.f32.mrf.mxu0
        %v1076 = vadd.f32 0.0, %v1075
        %v1077 = vpop.f32.mrf.mxu0
        %1078 = vmatprep.mubr.f32.mxu0 0.0
        %1079 = vmatmul.mubr.f32.gmra.mxu0 %v1007
        %v1080 = vpop.f32.mrf.mxu0
        %v1081 = vadd.f32 0.0, %v1080
        %v1082 = vpop.f32.mrf.mxu0
        %1083 = vdwg.mxu0
        %v1085 = vsel %vm601, %v789, 0
        %v1088 = vsel %vm601, %v794, 0
        %1090 = vmatprep.subr.mxu0 0.0
        %1091 = vmatpush1.msra.mxu0 0.0
        %1092 = vmatprep.subr.mxu0 0.0
        %1093 = vmatpush1.msra.mxu0 0.0
        %1094 = vmatprep.subr.mxu0 0.0
        %1095 = vmatpush1.msra.mxu0 0.0
        %1096 = vmatprep.subr.mxu0 0.0
        %1097 = vmatpush1.msra.mxu0 0.0
        %1098 = vmatprep.subr.mxu0 0.0
        %1099 = vmatpush1.msra.mxu0 0.0
        %1100 = vmatprep.subr.mxu0 0.0
        %1101 = vmatpush1.msra.mxu0 0.0
        %1102 = vmatprep.subr.mxu0 0.0
        %1103 = vmatpush1.msra.mxu0 0.0
        %1104 = vmatprep.subr.mxu0 0.0
        %1105 = vmatpush1.msra.mxu0 0.0
        %1106 = vmatprep.subr.mxu0 0.0
        %1107 = vmatpush1.msra.mxu0 0.0
        %1108 = vmatprep.subr.mxu0 0.0
        %1109 = vmatpush1.msra.mxu0 0.0
        %1110 = vmatprep.subr.mxu0 0.0
        %1111 = vmatpush1.msra.mxu0 0.0
        %1112 = vmatprep.subr.mxu0 0.0
        %1113 = vmatpush1.msra.mxu0 0.0
        %1114 = vmatprep.subr.mxu0 0.0
        %1115 = vmatpush1.msra.mxu0 0.0
        %1116 = vmatprep.subr.mxu0 0.0
        %1117 = vmatpush1.msra.mxu0 0.0
        %1118 = vmatprep.subr.mxu0 0.0
        %1119 = vmatpush1.msra.mxu0 %v798
        %1120 = vmatprep.subr.mxu0 0.0
        %1121 = vmatpush1.msra.mxu0 %v797
        %1122 = vmatprep.subr.mxu0 0.0
        %1123 = vmatpush2.msra.mxu0 0.0
        %1124 = vmatprep.subr.mxu0 0.0
        %1125 = vmatpush2.msra.mxu0 0.0
        %1126 = vmatprep.subr.mxu0 0.0
        %1127 = vmatpush2.msra.mxu0 0.0
        %1128 = vmatprep.subr.mxu0 0.0
        %1129 = vmatpush2.msra.mxu0 0.0
        %1130 = vmatprep.subr.mxu0 0.0
        %1131 = vmatpush2.msra.mxu0 0.0
        %1132 = vmatprep.subr.mxu0 0.0
        %1133 = vmatpush2.msra.mxu0 0.0
        %1134 = vmatprep.subr.mxu0 0.0
        %1135 = vmatpush2.msra.mxu0 0.0
        %1136 = vmatprep.subr.mxu0 0.0
        %1137 = vmatpush2.msra.mxu0 0.0
        %1138 = vmatprep.subr.mxu0 0.0
        %1139 = vmatpush2.msra.mxu0 0.0
        %1140 = vmatprep.subr.mxu0 0.0
        %1141 = vmatpush2.msra.mxu0 0.0
        %1142 = vmatprep.subr.mxu0 0.0
        %1143 = vmatpush2.msra.mxu0 0.0
        %1144 = vmatprep.subr.mxu0 0.0
        %1145 = vmatpush2.msra.mxu0 0.0
        %1146 = vmatprep.subr.mxu0 0.0
        %1147 = vmatpush2.msra.mxu0 0.0
        %1148 = vmatprep.subr.mxu0 0.0
        %1149 = vmatpush2.msra.mxu0 0.0
        %1150 = vmatprep.subr.mxu0 0.0
        %1151 = vmatpush2.msra.mxu0 0.0
        %1152 = vmatprep.subr.mxu0 0.0
        %1153 = vmatpush2.msra.mxu0 0.0
        %1154 = vmatprep.mubr.f32.mxu0 0.0
        %1155 = vmatmul.mubr.f32.gmra.mxu0 %v1085
        %v1156 = vpop.f32.mrf.mxu0
        %v1157 = vadd.f32 %v1076, %v1156
        %v1158 = vpop.f32.mrf.mxu0
        %1159 = vmatprep.mubr.f32.mxu0 0.0
        %1160 = vmatmul.mubr.f32.gmra.mxu0 %v1088
        %v1161 = vpop.f32.mrf.mxu0
        %v1162 = vadd.f32 %v1081, %v1161
        %v1163 = vpop.f32.mrf.mxu0
        %1164 = vdwg.mxu0
        %v1165 = vld [vmem:[%s6] sm:$0x1]
        %v1167 = vlaneseq
        %v1168 = vshrl.u32 %v1167, 7
        %v1169 = vsub.s32 0, %v1168
        %v1170 = vrot.slane %v1165, %v1169
        %v1172 = vadd.f32 %v1157, %v1170
        %v1173 = vadd.f32 %v1162, %v1170
        %1174 = vst.msk [vmem:[%s311] sm:$0xff] %vm515, %v1172
        %1175 = vst.msk [vmem:[%s311 + $0x8] sm:$0xff] %vm515, %v1173
        %s1176 = sand.u32 %s202, 1
        %s1177 = scalar_lea.sflag [#allocation5], %s1176
        %s1178 = sand.u32 %s202, 1
        %s1179 = smul.addr %s1178, 16
        %s1180 = scalar_lea.vmem [#allocation4], %s1179
        // Predicated region
        $region53: #{tpu_custom_call.1} parent=47 // pred_check
          %p1181 = pneg %p212
        $region54: #{tpu_custom_call.1} parent=47 // pred_check_branch
          %1183 = sbr.rel (%p1181) target = $region56
        $region55: #{tpu_custom_call.1} parent=47 // pred_region
          %s1184 = smul.u32 2, %s26
          %s1186 = ssub.s32 256, 256
          %1187 = vsyncadd %s1177, %s1186
          %s1188 = smul.addr %s25, 2
          %s1189 = sadd.s32 %s1184, %s1188
          %s1190 = smul.addr %s1189, 128
          %s1191 = scalar_lea.hbm %s7, %s1190
          %s1192 = sshll.u32 %s1180, 4
          %s1193 = int_to_ptr.vmem [resolvable:$true] %s1192
          %1198 = dma.vmem_to_hbm [thread:$0]  %s1193, 256, %s1191, %s1177, 128, 128, 8
        $region56: #{tpu_custom_call.1} parent=47 // pred_fallthru
          _
      $region48: #{tpu_custom_call.1} parent=5 // pred_fallthru
        _
      %p1199 = scmp.le.s32.totalorder 2, %s16
      // Predicated region
      $region57: #{tpu_custom_call.1} parent=5 // pred_check
        %p1200 = pneg %p1199
      $region58: #{tpu_custom_call.1} parent=5 // pred_check_branch
        %1202 = sbr.rel (%p1200) target = $region60
      $region59: #{tpu_custom_call.1} parent=5 // pred_region
        %s1203 = ssub.s32 %s16, 2
        // Predicated region
        $region61: #{tpu_custom_call.1} parent=59 // pred_check
          %p1204 = pneg %p218
        $region62: #{tpu_custom_call.1} parent=59 // pred_check_branch
          %1206 = sbr.rel (%p1204) target = $region64
        $region63: #{tpu_custom_call.1} parent=59 // pred_region
          %s1207 = sand.u32 %s203, 1
          %s1208 = scalar_lea.sflag [#allocation5], %s1207
          %s1209 = sand.u32 %s203, 1
          %s1210 = smul.addr %s1209, 16
          %s1211 = scalar_lea.vmem [#allocation4], %s1210
          %1212 = dma.done %s1208, 256
        $region64: #{tpu_custom_call.1} parent=59 // pred_fallthru
          _
      $region60: #{tpu_custom_call.1} parent=5 // pred_fallthru
        _
    $region6: #{tpu_custom_call.1} parent=1 // loop_footer
      %s20 = sadd.s32 1, %s16
    $region7: #{tpu_custom_call.1} parent=1 // loop_footer_branch
      %15 = sbr.rel target = $region3
    $region8: #{tpu_custom_call.1} parent=1 // loop_exit
      _
    %1213 = vsyncpa [#allocation5], 1
    %s1214 = scalar_lea.sflag [#allocation5], 1
    %1215 = vsyncpa %s1214, 1

</llo_original>
